<compile_context>
chip_gen: v6e
topology: v6e:2x2x1
jax: 0.10.0
libtpu: 0.0.40
codegen_flags: <defaults>
</compile_context>

<pallas_src>
import numpy as np
import jax
import jax.numpy as jnp
from jax import lax
from jax.experimental import pallas as pl
from jax.experimental.pallas import tpu as pltpu


def deepfefm_kernel(xt_ref, gtab_ref, w1t_ref, b1_ref, w2t_ref, b2_ref,
                    w3t_ref, b3_ref, out_ref):
    # xt_ref  : (F, tb)  int32 offset field indices for this batch tile (lanes=batch)
    # gtab_ref: (F, D+H1, Vp) per-field gather table:
    #             rows [0, D)      = emb_sum^T   (sum over the F embedding tables)
    #             rows [D, D+H1)   = afold_f = -0.5*W1_f^T@emb_sq^T + w1g_f (x) lin_shift_f
    # w1t_ref : (H1, F*D) = 0.5 * W1^T        b1_ref: (H1, 1)  (FEFM bias folded in)
    # w2t_ref : (H2, H1)                      b2_ref: (H2, 1)
    # w3t_ref : (1,  H2)                      b3_ref: (1, 1)
    # out_ref : (1, tb)  lane-dense sigmoid outputs
    F, tb = xt_ref.shape
    H1 = w1t_ref.shape[0]
    Vp = gtab_ref.shape[2]
    D = gtab_ref.shape[1] - H1

    # One-hot row-selection index, shared across fields (sublane axis = vocab).
    vio = lax.broadcasted_iota(jnp.int32, (Vp, tb), 0)

    s_parts = []          # per-field summed embeddings S[f] : (D, tb)
    zlin = None           # accumulated (-0.5*q + lin) contribution, pre-folded through W1
    for f in range(F):
        onehot = (vio == xt_ref[f:f + 1, :]).astype(jnp.float32)          # (Vp, tb)
        g = jnp.dot(gtab_ref[f], onehot,
                    preferred_element_type=jnp.float32)                   # (D+H1, tb)
        s_parts.append(g[:D, :])
        zlin = g[D:, :] if zlin is None else zlin + g[D:, :]

    s = jnp.concatenate(s_parts, axis=0)                                  # (F*D, tb)

    # Layer 1:  z = 0.5*W1^T @ S^2  +  (folded -0.5*q + lin terms)  +  b1_eff
    z = jnp.dot(w1t_ref[...], s * s, preferred_element_type=jnp.float32)
    z = jnp.maximum(z + zlin + b1_ref[...], 0.0)                          # (H1, tb)

    h = jnp.dot(w2t_ref[...], z, preferred_element_type=jnp.float32) + b2_ref[...]
    h = jnp.maximum(h, 0.0)                                               # (H2, tb)

    logit = jnp.dot(w3t_ref[...], h, preferred_element_type=jnp.float32) + b3_ref[...]
    out_ref[...] = jax.nn.sigmoid(logit)                                  # (1, tb)


def _ru(v, m):
    return (v + m - 1) // m * m


def deepfefm_forward(x, params, *, block_batch=2048):
    """x: (B, F) int32 field indices.  Returns (B,) float32 probabilities."""
    emb_tables = params["emb_tables"]            # (F, vocab, D)
    lin_table = params["lin_table"]              # (vocab, 1)
    offsets = params["offsets"]                  # (F,) int32
    w1, b1 = params["w1"], params["b1"]          # (F*D, H1), (1, H1)
    w2, b2 = params["w2"], params["b2"]          # (H1, H2), (1, H2)
    w3, b3 = params["w3"], params["b3"]          # (H2, 1), (1, 1)

    B, F = x.shape
    vocab, D = emb_tables.shape[1], emb_tables.shape[2]
    FD = F * D
    H1, H2 = w1.shape[1], w2.shape[1]
    Vp = _ru(vocab, 128)                         # lane-padded vocab for the one-hot K dim
    assert Vp <= 2048, "in-kernel one-hot gather targets small vocab (see TODO)"
    assert block_batch % 128 == 0, "batch tile must be lane-aligned"

    # ---- batch tiling: big tiles to amortize per-step overhead, but cap near
    # ceil(B/2) so v7x's two TensorCores both get work on the "parallel" axis.
    half_b = _ru((B + 1) // 2, 128)
    tb = max(128, min(block_batch, half_b))
    n_tiles = pl.cdiv(B, tb)
    Bp = n_tiles * tb

    # ---- glue: indices only (no embedding slab ever touches HBM) --------------
    x_pad = jnp.pad(x, ((0, Bp - B), (0, 0))) if Bp != B else x
    xt = (x_pad.astype(jnp.int32) + offsets[None, :].astype(jnp.int32)).T   # (F, Bp)

    # ---- tiny one-time folds (host/XLA side, all f32, exact up to reassoc) ----
    emb_sum = emb_tables.sum(axis=0)                                        # (vocab, D)
    emb_sq = jnp.square(emb_tables).sum(axis=0)                             # (vocab, D)
    pad_v = Vp - vocab
    emb_sum_t = jnp.pad(emb_sum, ((0, pad_v), (0, 0))).T                    # (D, Vp)
    emb_sq_t = jnp.pad(emb_sq, ((0, pad_v), (0, 0))).T                      # (D, Vp)

    w1_f = w1.reshape(F, D, H1)                                             # per-field W1 slices
    v_idx = jnp.arange(Vp, dtype=jnp.int32)
    gtab_list = []
    for f in range(F):
        # -0.5 * sum_t e_t^2, pre-folded through this field's W1 columns.
        qfold = -0.5 * (w1_f[f].T @ emb_sq_t)                               # (H1, Vp)
        # FEFM linear term uses RAW (un-offset) indices per the reference code;
        # within field f the offset index v maps back to raw index v - off_f.
        raw = jnp.clip(v_idx - offsets[f], 0, vocab - 1)
        lin_shift = lin_table[raw, 0]                                       # (Vp,)
        lfold = w1_f[f].sum(axis=0)[:, None] * lin_shift[None, :]           # (H1, Vp)
        gtab_list.append(jnp.concatenate([emb_sum_t, qfold + lfold], axis=0))
    gtab = jnp.stack(gtab_list, axis=0).astype(jnp.float32)                 # (F, D+H1, Vp)

    w1t_half = (0.5 * w1.T).astype(jnp.float32)                             # (H1, FD)
    b1e = (b1.reshape(-1) + params["fefm_bias"][0] * w1.sum(axis=0))[:, None]
    w2t = w2.T                                                              # (H2, H1)
    b2c = b2.reshape(-1)[:, None]                                           # (H2, 1)
    w3t = w3.T                                                              # (1, H2)
    b3c = b3.reshape(1, 1)

    batch_map = lambda i: (0, i)
    const2 = lambda i: (0, 0)
    const3 = lambda i: (0, 0, 0)

    # ---- VMEM budget from actual buffer math (+2x headroom on temporaries) ----
    g_rows = D + H1
    io_bytes = 2 * _ru(F, 8) * tb * 4 + 2 * 8 * tb * 4                      # xt + out (dbl-buffered)
    const_bytes = 2 * 4 * (F * _ru(g_rows, 8) * Vp
                           + _ru(H1, 8) * _ru(FD, 128) + _ru(H1, 8) * 128
                           + _ru(H2, 8) * _ru(H1, 128) + _ru(H2, 8) * 128
                           + 8 * _ru(H2, 128) + 8 * 128)
    tmp_bytes = 2 * tb * 4 * (2 * Vp + 4 * g_rows + 3 * FD + 4 * H1 + 2 * H2)
    vmem_limit = max(8 << 20,
                     min(32 << 20, _ru(io_bytes + const_bytes + tmp_bytes, 1 << 20) + (2 << 20)))

    flops = int(Bp) * (2 * F * g_rows * Vp + F * Vp           # gathers + one-hot compares
                       + 2 * H1 * FD + FD                     # layer 1 + square
                       + 2 * H2 * H1 + 2 * H2 + 6 * H1)
    bytes_accessed = (int(Bp) * (F + 1) * 4
                      + 4 * (F * g_rows * Vp + H1 * FD + H1 + H2 * H1 + H2 + H2 + 1))

    out = pl.pallas_call(
        deepfefm_kernel,
        out_shape=jax.ShapeDtypeStruct((1, Bp), jnp.float32),
        grid_spec=pltpu.PrefetchScalarGridSpec(
            num_scalar_prefetch=0,
            grid=(n_tiles,),
            in_specs=[
                pl.BlockSpec((F, tb), batch_map),          # indices  (pipelined)
                pl.BlockSpec((F, g_rows, Vp), const3),     # gather tables (resident)
                pl.BlockSpec((H1, FD), const2),            # 0.5*W1^T      (resident)
                pl.BlockSpec((H1, 1), const2),             # b1_eff
                pl.BlockSpec((H2, H1), const2),            # W2^T
                pl.BlockSpec((H2, 1), const2),             # b2
                pl.BlockSpec((1, H2), const2),             # W3^T
                pl.BlockSpec((1, 1), const2),              # b3
            ],
            out_specs=pl.BlockSpec((1, tb), lambda i: (0, i)),
        ),
        compiler_params=pltpu.CompilerParams(
            dimension_semantics=("parallel",),             # v7x: tiles split over both TCs
            vmem_limit_bytes=int(vmem_limit),
        ),
        cost_estimate=pl.CostEstimate(
            flops=flops, transcendentals=int(Bp), bytes_accessed=bytes_accessed),
    )(xt, gtab, w1t_half, b1e, w2t, b2c, w3t, b3c)

    return out[0, :B]                                                      # (B,)


def deepfefm_reference(x, params):
    """Pure-JAX reference mirroring the PyTorch forward (with the F*D flatten)."""
    emb_tables = params["emb_tables"]
    offsets = params["offsets"]
    B, F = x.shape
    D = emb_tables.shape[-1]
    x_off = x + offsets[None, :]
    field_embs = [emb_tables[t][x_off] for t in range(F)]              # each (B, F, D)
    inter = jnp.zeros((B, F, D), jnp.float32)
    for i in range(F):
        for j in range(i + 1, F):
            inter = inter + field_embs[i] * field_embs[j]
    lin = params["lin_table"][x]                                       # (B, F, 1)
    fefm = lin + inter + params["fefm_bias"]                           # (B, F, D)
    h = fefm.reshape(B, F * D)
    h = jnp.maximum(h @ params["w1"] + params["b1"], 0.0)
    h = jnp.maximum(h @ params["w2"] + params["b2"], 0.0)
    logit = h @ params["w3"] + params["b3"]
    return jax.nn.sigmoid(logit)[:, 0]


def init_params(key, field_dims, embed_dim, mlp_dims):
    F = len(field_dims)
    vocab = int(sum(field_dims))
    D = embed_dim
    ks = jax.random.split(key, 3 + 2 * (len(mlp_dims) + 1))

    def xavier(k, shape):
        bound = float(np.sqrt(6.0 / (shape[-2] + shape[-1])))
        return jax.random.uniform(k, shape, jnp.float32, -bound, bound)

    params = {}
    params["emb_tables"] = xavier(ks[0], (F, vocab, D))                # field-aware tables
    params["lin_table"] = xavier(ks[1], (vocab, 1))
    params["fefm_bias"] = jnp.zeros((1,), jnp.float32)
    params["offsets"] = jnp.asarray(
        np.concatenate([[0], np.cumsum(field_dims)[:-1]]).astype(np.int32))

    dims = [F * D] + list(mlp_dims) + [1]
    names = [("w1", "b1"), ("w2", "b2"), ("w3", "b3")]
    for li, (wn, bn) in enumerate(names):
        kw = ks[2 + 2 * li]
        bound = float(1.0 / np.sqrt(dims[li]))
        params[wn] = jax.random.uniform(kw, (dims[li], dims[li + 1]),
                                        jnp.float32, -bound, bound)
        params[bn] = jnp.zeros((1, dims[li + 1]), jnp.float32)
    return params


if __name__ == "__main__":
    field_dims = [10, 8, 6, 16]     # F = 4 fields, vocab = 40
    embed_dim = 8                   # F*D = 32
    mlp_dims = (32, 16)
    batch = 256

    key = jax.random.PRNGKey(0)
    kp, kx = jax.random.split(key)
    params = init_params(kp, field_dims, embed_dim, mlp_dims)

    # per-field indices in [0, field_dims[f])
    cols = []
    for fd in field_dims:
        kx, kc = jax.random.split(kx)
        cols.append(jax.random.randint(kc, (batch,), 0, fd, jnp.int32))
    x = jnp.stack(cols, axis=1)     # (batch, F) int32

    # With B=256 the tile-capping logic picks tb=128 -> 2-tile grid, which both
    # exercises the pipeline and lets v7x's two TensorCores split the work.
    out = deepfefm_forward(x, params)
    out = jax.block_until_ready(out)

    ref = deepfefm_reference(x, params)
    np.testing.assert_allclose(np.asarray(out), np.asarray(ref),
                               rtol=3e-3, atol=1e-3)
    print("KERNEL_OK")
</pallas_src>

<mosaic_0001>
module attributes {stable_mosaic.version = 11 : i64} {
  func.func @deepfefm_kernel(%arg0: i32, %arg1: memref<4x128xi32, #tpu.memory_space<vmem>>, %arg2: memref<4x40x128xf32, #tpu.memory_space<vmem>>, %arg3: memref<32x32xf32, #tpu.memory_space<vmem>>, %arg4: memref<32x1xf32, #tpu.memory_space<vmem>>, %arg5: memref<16x32xf32, #tpu.memory_space<vmem>>, %arg6: memref<16x1xf32, #tpu.memory_space<vmem>>, %arg7: memref<1x16xf32, #tpu.memory_space<vmem>>, %arg8: memref<1x1xf32, #tpu.memory_space<vmem>>, %arg9: memref<1x128xf32, #tpu.memory_space<vmem>>) attributes {dimension_semantics = [#tpu.dimension_semantics<parallel>], iteration_bounds = array<i64: 2>, scalar_prefetch = 0 : i64, scratch_operands = 0 : i64, tpu.core_type = #tpu.core_type<tc>, window_params = [{transform_indices = @transform_0, window_bounds = array<i64: 4, 128>}, {pipeline_mode = #tpu.pipeline_mode<synchronous>, transform_indices = @transform_1, window_bounds = array<i64: 4, 40, 128>}, {pipeline_mode = #tpu.pipeline_mode<synchronous>, transform_indices = @transform_2, window_bounds = array<i64: 32, 32>}, {pipeline_mode = #tpu.pipeline_mode<synchronous>, transform_indices = @transform_3, window_bounds = array<i64: 32, 1>}, {pipeline_mode = #tpu.pipeline_mode<synchronous>, transform_indices = @transform_4, window_bounds = array<i64: 16, 32>}, {pipeline_mode = #tpu.pipeline_mode<synchronous>, transform_indices = @transform_5, window_bounds = array<i64: 16, 1>}, {pipeline_mode = #tpu.pipeline_mode<synchronous>, transform_indices = @transform_6, window_bounds = array<i64: 1, 16>}, {pipeline_mode = #tpu.pipeline_mode<synchronous>, transform_indices = @transform_7, window_bounds = array<i64: 1, 1>}, {transform_indices = @transform_8, window_bounds = array<i64: 1, 128>}]} {
    %0 = tpu.iota {dimensions = array<i32: 0>} : vector<128x128xi32>
    %c0 = arith.constant 0 : index
    %c0_0 = arith.constant 0 : index
    %1 = vector.load %arg1[%c0, %c0_0] : memref<4x128xi32, #tpu.memory_space<vmem>>, vector<1x128xi32>
    %2 = vector.broadcast %1 : vector<1x128xi32> to vector<128x128xi32>
    %3 = arith.cmpi eq, %0, %2 : vector<128x128xi32>
    %4 = arith.extui %3 : vector<128x128xi1> to vector<128x128xi32>
    %5 = arith.sitofp %4 : vector<128x128xi32> to vector<128x128xf32>
    %c0_1 = arith.constant 0 : index
    %c0_2 = arith.constant 0 : index
    %c0_3 = arith.constant 0 : index
    %6 = vector.load %arg2[%c0_1, %c0_2, %c0_3] : memref<4x40x128xf32, #tpu.memory_space<vmem>>, vector<1x40x128xf32>
    %7 = vector.shape_cast %6 : vector<1x40x128xf32> to vector<40x128xf32>
    %cst = arith.constant dense<0.000000e+00> : vector<40x128xf32>
    %8 = tpu.matmul %7, %5, %cst {dimension_numbers = #tpu.dot_dimension_numbers<[1], [0], [0], [1], [0, 0, 1, 1], [], []>} : vector<40x128xf32>, vector<128x128xf32>, vector<40x128xf32> -> vector<40x128xf32>
    %9 = vector.extract_strided_slice %8 {offsets = [0, 0], sizes = [8, 128], strides = [1, 1]} : vector<40x128xf32> to vector<8x128xf32>
    %10 = vector.extract_strided_slice %8 {offsets = [8, 0], sizes = [32, 128], strides = [1, 1]} : vector<40x128xf32> to vector<32x128xf32>
    %c1 = arith.constant 1 : index
    %c0_4 = arith.constant 0 : index
    %11 = vector.load %arg1[%c1, %c0_4] : memref<4x128xi32, #tpu.memory_space<vmem>>, vector<1x128xi32>
    %12 = vector.broadcast %11 : vector<1x128xi32> to vector<128x128xi32>
    %13 = arith.cmpi eq, %0, %12 : vector<128x128xi32>
    %14 = arith.extui %13 : vector<128x128xi1> to vector<128x128xi32>
    %15 = arith.sitofp %14 : vector<128x128xi32> to vector<128x128xf32>
    %c1_5 = arith.constant 1 : index
    %c0_6 = arith.constant 0 : index
    %c0_7 = arith.constant 0 : index
    %16 = vector.load %arg2[%c1_5, %c0_6, %c0_7] : memref<4x40x128xf32, #tpu.memory_space<vmem>>, vector<1x40x128xf32>
    %17 = vector.shape_cast %16 : vector<1x40x128xf32> to vector<40x128xf32>
    %cst_8 = arith.constant dense<0.000000e+00> : vector<40x128xf32>
    %18 = tpu.matmul %17, %15, %cst_8 {dimension_numbers = #tpu.dot_dimension_numbers<[1], [0], [0], [1], [0, 0, 1, 1], [], []>} : vector<40x128xf32>, vector<128x128xf32>, vector<40x128xf32> -> vector<40x128xf32>
    %19 = vector.extract_strided_slice %18 {offsets = [0, 0], sizes = [8, 128], strides = [1, 1]} : vector<40x128xf32> to vector<8x128xf32>
    %20 = vector.extract_strided_slice %18 {offsets = [8, 0], sizes = [32, 128], strides = [1, 1]} : vector<40x128xf32> to vector<32x128xf32>
    %21 = arith.addf %10, %20 : vector<32x128xf32>
    %c2 = arith.constant 2 : index
    %c0_9 = arith.constant 0 : index
    %22 = vector.load %arg1[%c2, %c0_9] : memref<4x128xi32, #tpu.memory_space<vmem>>, vector<1x128xi32>
    %23 = vector.broadcast %22 : vector<1x128xi32> to vector<128x128xi32>
    %24 = arith.cmpi eq, %0, %23 : vector<128x128xi32>
    %25 = arith.extui %24 : vector<128x128xi1> to vector<128x128xi32>
    %26 = arith.sitofp %25 : vector<128x128xi32> to vector<128x128xf32>
    %c2_10 = arith.constant 2 : index
    %c0_11 = arith.constant 0 : index
    %c0_12 = arith.constant 0 : index
    %27 = vector.load %arg2[%c2_10, %c0_11, %c0_12] : memref<4x40x128xf32, #tpu.memory_space<vmem>>, vector<1x40x128xf32>
    %28 = vector.shape_cast %27 : vector<1x40x128xf32> to vector<40x128xf32>
    %cst_13 = arith.constant dense<0.000000e+00> : vector<40x128xf32>
    %29 = tpu.matmul %28, %26, %cst_13 {dimension_numbers = #tpu.dot_dimension_numbers<[1], [0], [0], [1], [0, 0, 1, 1], [], []>} : vector<40x128xf32>, vector<128x128xf32>, vector<40x128xf32> -> vector<40x128xf32>
    %30 = vector.extract_strided_slice %29 {offsets = [0, 0], sizes = [8, 128], strides = [1, 1]} : vector<40x128xf32> to vector<8x128xf32>
    %31 = vector.extract_strided_slice %29 {offsets = [8, 0], sizes = [32, 128], strides = [1, 1]} : vector<40x128xf32> to vector<32x128xf32>
    %32 = arith.addf %21, %31 : vector<32x128xf32>
    %c3 = arith.constant 3 : index
    %c0_14 = arith.constant 0 : index
    %33 = vector.load %arg1[%c3, %c0_14] : memref<4x128xi32, #tpu.memory_space<vmem>>, vector<1x128xi32>
    %34 = vector.broadcast %33 : vector<1x128xi32> to vector<128x128xi32>
    %35 = arith.cmpi eq, %0, %34 : vector<128x128xi32>
    %36 = arith.extui %35 : vector<128x128xi1> to vector<128x128xi32>
    %37 = arith.sitofp %36 : vector<128x128xi32> to vector<128x128xf32>
    %c3_15 = arith.constant 3 : index
    %c0_16 = arith.constant 0 : index
    %c0_17 = arith.constant 0 : index
    %38 = vector.load %arg2[%c3_15, %c0_16, %c0_17] : memref<4x40x128xf32, #tpu.memory_space<vmem>>, vector<1x40x128xf32>
    %39 = vector.shape_cast %38 : vector<1x40x128xf32> to vector<40x128xf32>
    %cst_18 = arith.constant dense<0.000000e+00> : vector<40x128xf32>
    %40 = tpu.matmul %39, %37, %cst_18 {dimension_numbers = #tpu.dot_dimension_numbers<[1], [0], [0], [1], [0, 0, 1, 1], [], []>} : vector<40x128xf32>, vector<128x128xf32>, vector<40x128xf32> -> vector<40x128xf32>
    %41 = vector.extract_strided_slice %40 {offsets = [0, 0], sizes = [8, 128], strides = [1, 1]} : vector<40x128xf32> to vector<8x128xf32>
    %42 = vector.extract_strided_slice %40 {offsets = [8, 0], sizes = [32, 128], strides = [1, 1]} : vector<40x128xf32> to vector<32x128xf32>
    %43 = arith.addf %32, %42 : vector<32x128xf32>
    %44 = tpu.concatenate %9, %19, %30, %41 in 0 : vector<8x128xf32>, vector<8x128xf32>, vector<8x128xf32>, vector<8x128xf32> -> vector<32x128xf32>
    %c0_19 = arith.constant 0 : index
    %c0_20 = arith.constant 0 : index
    %45 = vector.load %arg3[%c0_19, %c0_20] : memref<32x32xf32, #tpu.memory_space<vmem>>, vector<32x32xf32>
    %46 = arith.mulf %44, %44 : vector<32x128xf32>
    %cst_21 = arith.constant dense<0.000000e+00> : vector<32x128xf32>
    %47 = tpu.matmul %45, %46, %cst_21 {dimension_numbers = #tpu.dot_dimension_numbers<[1], [0], [0], [1], [0, 0, 1, 1], [], []>} : vector<32x32xf32>, vector<32x128xf32>, vector<32x128xf32> -> vector<32x128xf32>
    %48 = arith.addf %47, %43 : vector<32x128xf32>
    %c0_22 = arith.constant 0 : index
    %c0_23 = arith.constant 0 : index
    %49 = vector.load %arg4[%c0_22, %c0_23] : memref<32x1xf32, #tpu.memory_space<vmem>>, vector<32x1xf32>
    %50 = vector.broadcast %49 : vector<32x1xf32> to vector<32x128xf32>
    %51 = arith.addf %48, %50 : vector<32x128xf32>
    %cst_24 = arith.constant 0.000000e+00 : f32
    %52 = vector.broadcast %cst_24 : f32 to vector<32x128xf32>
    %53 = arith.maximumf %51, %52 : vector<32x128xf32>
    %c0_25 = arith.constant 0 : index
    %c0_26 = arith.constant 0 : index
    %54 = vector.load %arg5[%c0_25, %c0_26] : memref<16x32xf32, #tpu.memory_space<vmem>>, vector<16x32xf32>
    %cst_27 = arith.constant dense<0.000000e+00> : vector<16x128xf32>
    %55 = tpu.matmul %54, %53, %cst_27 {dimension_numbers = #tpu.dot_dimension_numbers<[1], [0], [0], [1], [0, 0, 1, 1], [], []>} : vector<16x32xf32>, vector<32x128xf32>, vector<16x128xf32> -> vector<16x128xf32>
    %c0_28 = arith.constant 0 : index
    %c0_29 = arith.constant 0 : index
    %56 = vector.load %arg6[%c0_28, %c0_29] : memref<16x1xf32, #tpu.memory_space<vmem>>, vector<16x1xf32>
    %57 = vector.broadcast %56 : vector<16x1xf32> to vector<16x128xf32>
    %58 = arith.addf %55, %57 : vector<16x128xf32>
    %cst_30 = arith.constant 0.000000e+00 : f32
    %59 = vector.broadcast %cst_30 : f32 to vector<16x128xf32>
    %60 = arith.maximumf %58, %59 : vector<16x128xf32>
    %c0_31 = arith.constant 0 : index
    %c0_32 = arith.constant 0 : index
    %61 = vector.load %arg7[%c0_31, %c0_32] : memref<1x16xf32, #tpu.memory_space<vmem>>, vector<1x16xf32>
    %cst_33 = arith.constant dense<0.000000e+00> : vector<1x128xf32>
    %62 = tpu.matmul %61, %60, %cst_33 {dimension_numbers = #tpu.dot_dimension_numbers<[1], [0], [0], [1], [0, 0, 1, 1], [], []>} : vector<1x16xf32>, vector<16x128xf32>, vector<1x128xf32> -> vector<1x128xf32>
    %c0_34 = arith.constant 0 : index
    %c0_35 = arith.constant 0 : index
    %63 = vector.load %arg8[%c0_34, %c0_35] : memref<1x1xf32, #tpu.memory_space<vmem>>, vector<1x1xf32>
    %64 = vector.broadcast %63 : vector<1x1xf32> to vector<1x128xf32>
    %65 = arith.addf %62, %64 : vector<1x128xf32>
    %66 = arith.negf %65 : vector<1x128xf32>
    %67 = math.exp %66 : vector<1x128xf32>
    %cst_36 = arith.constant 1.000000e+00 : f32
    %68 = vector.broadcast %cst_36 : f32 to vector<1x128xf32>
    %69 = arith.addf %68, %67 : vector<1x128xf32>
    %70 = arith.divf %68, %69 : vector<1x128xf32>
    %c0_37 = arith.constant 0 : index
    %c0_38 = arith.constant 0 : index
    %71 = vector.load %arg9[%c0_37, %c0_38] : memref<1x128xf32, #tpu.memory_space<vmem>>, vector<1x128xf32>
    tpu.vector_store %arg9[%c0_37, %c0_38], %70 {strides = array<i32>} : memref<1x128xf32, #tpu.memory_space<vmem>>, vector<1x128xf32>,
    return
  }
  func.func @transform_0(%arg0: i32) -> (i32, i32) {
    %c0_i32 = arith.constant 0 : i32
    %c0_i32_0 = arith.constant 0 : i32
    return %c0_i32, %arg0 : i32, i32
  }
  func.func @transform_1(%arg0: i32) -> (i32, i32, i32) {
    %c0_i32 = arith.constant 0 : i32
    %c0_i32_0 = arith.constant 0 : i32
    %c0_i32_1 = arith.constant 0 : i32
    %c0_i32_2 = arith.constant 0 : i32
    return %c0_i32, %c0_i32_0, %c0_i32_1 : i32, i32, i32
  }
  func.func @transform_2(%arg0: i32) -> (i32, i32) {
    %c0_i32 = arith.constant 0 : i32
    %c0_i32_0 = arith.constant 0 : i32
    %c0_i32_1 = arith.constant 0 : i32
    return %c0_i32, %c0_i32_0 : i32, i32
  }
  func.func @transform_3(%arg0: i32) -> (i32, i32) {
    %c0_i32 = arith.constant 0 : i32
    %c0_i32_0 = arith.constant 0 : i32
    %c0_i32_1 = arith.constant 0 : i32
    return %c0_i32, %c0_i32_0 : i32, i32
  }
  func.func @transform_4(%arg0: i32) -> (i32, i32) {
    %c0_i32 = arith.constant 0 : i32
    %c0_i32_0 = arith.constant 0 : i32
    %c0_i32_1 = arith.constant 0 : i32
    return %c0_i32, %c0_i32_0 : i32, i32
  }
  func.func @transform_5(%arg0: i32) -> (i32, i32) {
    %c0_i32 = arith.constant 0 : i32
    %c0_i32_0 = arith.constant 0 : i32
    %c0_i32_1 = arith.constant 0 : i32
    return %c0_i32, %c0_i32_0 : i32, i32
  }
  func.func @transform_6(%arg0: i32) -> (i32, i32) {
    %c0_i32 = arith.constant 0 : i32
    %c0_i32_0 = arith.constant 0 : i32
    %c0_i32_1 = arith.constant 0 : i32
    return %c0_i32, %c0_i32_0 : i32, i32
  }
  func.func @transform_7(%arg0: i32) -> (i32, i32) {
    %c0_i32 = arith.constant 0 : i32
    %c0_i32_0 = arith.constant 0 : i32
    %c0_i32_1 = arith.constant 0 : i32
    return %c0_i32, %c0_i32_0 : i32, i32
  }
  func.func @transform_8(%arg0: i32) -> (i32, i32) {
    %c0_i32 = arith.constant 0 : i32
    %c0_i32_0 = arith.constant 0 : i32
    return %c0_i32, %arg0 : i32, i32
  }
}

</mosaic_0001>

<llo_original>
// kernel: tpu_custom_call.1
$region0: #{tpu_custom_call.1}
  #allocation0 [shape = 'u32[]', space=smem, size = 0x4, offset = 0x4, fixed_abs, tag = 'smem constant byte address 0x4 - core index']
  #allocation1 [shape = 'u32[144,128]{1,0:T(1,128)}', space=vmem, size = 0x12000, scoped, tag = 'internal scratch']
  #allocation2 [shape = 'f32[1,1]{1,0:T(1,128)S(1)}', space=vmem, size = 0x200, scoped, tag = 'scoped memory for tpu_custom_call.1']
  %s0 = inlined_call_operand.hbm [shape: s32[4,256], index: 0, kind: input, shape index: {}]
  %s1 = inlined_call_operand.hbm [shape: f32[4,40,128], index: 1, kind: input, shape index: {}]
  %s2 = inlined_call_operand.vmem [shape: f32[32,32], index: 2, kind: input, shape index: {}]
  %s3 = inlined_call_operand.vmem [shape: f32[32,1], index: 3, kind: input, shape index: {}]
  %s4 = inlined_call_operand.vmem [shape: f32[16,32], index: 4, kind: input, shape index: {}]
  %s5 = inlined_call_operand.vmem [shape: f32[16,1], index: 5, kind: input, shape index: {}]
  %s6 = inlined_call_operand.vmem [shape: f32[1,16], index: 6, kind: input, shape index: {}]
  %s7 = inlined_call_operand.<no memory space> [shape: f32[1,1], index: 7, kind: input, shape index: {}]
  %s8 = inlined_call_operand.hbm [shape: f32[1,256], index: 8, kind: output, shape index: {}]
  %s9 = sld [smem:[#allocation0]]
  $region73: #{tpu_custom_call.1} parent=0
    _
  %s11 = ssub.s32 1, %s9
  %s12 = scalar_select 0, %s11, %s9
  %v13 = vstv %s7
  %14 = vst [vmem:[#allocation2] sm:$0x1] %v13
  $region1: #{tpu_custom_call.1} parent=0
    #allocation3 [shape = 'u8[4096]{0}', space=vmem, size = 0x1000, scoped, tag = 'input window, operand 0']
    #allocation4 [shape = 's32[2]{0}', space=sflag, size = 0x8, scoped, tag = 'scoped memory for tpu_custom_call.1']
    #allocation5 [shape = 's32[2]{0}', space=sflag, size = 0x8, scoped, tag = 'scoped memory for tpu_custom_call.1']
    #allocation6 [shape = 'u8[81920]{0}', space=vmem, size = 0x14000, scoped, tag = 'input window, operand 1, single buffered']
    #allocation7 [shape = 's32[1]{0}', space=sflag, size = 0x4, scoped, tag = 'scoped memory for tpu_custom_call.1']
    #allocation8 [shape = 'u8[1024]{0}', space=vmem, size = 0x400, scoped, tag = 'output window, operand 0']
    %15 = vsyncpa [#allocation4], 0
    %s16 = scalar_lea.sflag [#allocation4], 1
    %17 = vsyncpa %s16, 0
    %18 = vsyncpa [#allocation7], 0
    %19 = vsyncpa [#allocation5], 0
    %s20 = scalar_lea.sflag [#allocation5], 1
    %21 = vsyncpa %s20, 0
    loop: start=0, step=1, limit=4
    $region2: #{tpu_custom_call.1} parent=1 // loop_pre_header
      _
    $region3: #{tpu_custom_call.1} parent=1 // loop_header
      %s23 = sphi 0, %s27
      %p24 = scmp.ge.s32.totalorder %s23, 4
      %s33 = sphi 0, %s35
      %s36 = sphi 0, %s33
      %s37 = sphi 0, %s36
      %s53 = sphi 0, %s37
      %s57 = sphi 0, %s57
      %s59 = sphi 0, %s57
      %s60 = sphi 0, %s59
      %s74 = sphi 0, %s60
      %s78 = sphi 0, %s78
      %s80 = sphi 0, %s78
      %s81 = sphi 0, %s80
      %s95 = sphi 0, %s81
      %s99 = sphi 0, %s99
      %s101 = sphi 0, %s99
      %s102 = sphi 0, %s101
      %s116 = sphi 0, %s102
      %s120 = sphi 0, %s120
      %s122 = sphi 0, %s120
      %s123 = sphi 0, %s122
      %s137 = sphi 0, %s123
      %s141 = sphi 0, %s141
      %s143 = sphi 0, %s141
      %s144 = sphi 0, %s143
      %s158 = sphi 0, %s144
      %s162 = sphi 0, %s162
      %s164 = sphi 0, %s162
      %s165 = sphi 0, %s164
      %s179 = sphi 0, %s165
      %s183 = sphi 0, %s183
      %s185 = sphi 0, %s183
      %s186 = sphi 0, %s185
      %s200 = sphi 0, %s186
      %s206 = sphi 0, %s208
      %s209 = sphi 0, %s206
      %s210 = sphi 0, %s209
      %s226 = sphi 0, %s210
    $region4: #{tpu_custom_call.1} parent=1 // loop_header_branch
      %26 = sbr.rel (%p24) target = $region8
    $region5: #{tpu_custom_call.1} parent=1 // loop_body
      %s28 = ssub.s32 %s23, 1
      %s29 = ssub.s32 %s23, 2
      %s30 = sadd.s32 %s23, 1
      %s31 = ssub.s32 %s23, %s30
      %p32 = scmp.eq.s32.totalorder %s31, 0
      %s34 = sadd.s32 %s33, 1
      %s35 = scalar_select %p32, %s33, %s34
      %p38 = pneg %p32
      %p39 = scmp.eq.s32.totalorder %s23, 1
      %p40 = por %p38, %p39
      %p41 = scmp.ne.s32.totalorder %s33, %s36
      %p42 = scmp.eq.s32.totalorder %s23, 0
      %p43 = por %p41, %p42
      %p44 = scmp.ne.s32.totalorder %s33, %s36
      %p45 = scmp.eq.s32.totalorder %s28, 1
      %p46 = por %p44, %p45
      %p47 = scmp.ne.s32.totalorder %s36, %s37
      %p48 = scmp.eq.s32.totalorder %s28, 0
      %p49 = por %p47, %p48
      %p50 = scmp.ne.s32.totalorder %s36, %s37
      %p51 = scmp.eq.s32.totalorder %s29, 1
      %p52 = por %p50, %p51
      %p54 = scmp.ne.s32.totalorder %s37, %s53
      %p55 = scmp.eq.s32.totalorder %s29, 0
      %p56 = por %p54, %p55
      %s58 = sadd.s32 %s57, 1
      %p61 = scmp.eq.s32.totalorder %s23, 1
      %p62 = scmp.ne.s32.totalorder %s57, %s59
      %p63 = scmp.eq.s32.totalorder %s23, 0
      %p64 = por %p62, %p63
      %p65 = scmp.ne.s32.totalorder %s57, %s59
      %p66 = scmp.eq.s32.totalorder %s28, 1
      %p67 = por %p65, %p66
      %p68 = scmp.ne.s32.totalorder %s59, %s60
      %p69 = scmp.eq.s32.totalorder %s28, 0
      %p70 = por %p68, %p69
      %p71 = scmp.ne.s32.totalorder %s59, %s60
      %p72 = scmp.eq.s32.totalorder %s29, 1
      %p73 = por %p71, %p72
      %p75 = scmp.ne.s32.totalorder %s60, %s74
      %p76 = scmp.eq.s32.totalorder %s29, 0
      %p77 = por %p75, %p76
      %s79 = sadd.s32 %s78, 1
      %p82 = scmp.eq.s32.totalorder %s23, 1
      %p83 = scmp.ne.s32.totalorder %s78, %s80
      %p84 = scmp.eq.s32.totalorder %s23, 0
      %p85 = por %p83, %p84
      %p86 = scmp.ne.s32.totalorder %s78, %s80
      %p87 = scmp.eq.s32.totalorder %s28, 1
      %p88 = por %p86, %p87
      %p89 = scmp.ne.s32.totalorder %s80, %s81
      %p90 = scmp.eq.s32.totalorder %s28, 0
      %p91 = por %p89, %p90
      %p92 = scmp.ne.s32.totalorder %s80, %s81
      %p93 = scmp.eq.s32.totalorder %s29, 1
      %p94 = por %p92, %p93
      %p96 = scmp.ne.s32.totalorder %s81, %s95
      %p97 = scmp.eq.s32.totalorder %s29, 0
      %p98 = por %p96, %p97
      %s100 = sadd.s32 %s99, 1
      %p103 = scmp.eq.s32.totalorder %s23, 1
      %p104 = scmp.ne.s32.totalorder %s99, %s101
      %p105 = scmp.eq.s32.totalorder %s23, 0
      %p106 = por %p104, %p105
      %p107 = scmp.ne.s32.totalorder %s99, %s101
      %p108 = scmp.eq.s32.totalorder %s28, 1
      %p109 = por %p107, %p108
      %p110 = scmp.ne.s32.totalorder %s101, %s102
      %p111 = scmp.eq.s32.totalorder %s28, 0
      %p112 = por %p110, %p111
      %p113 = scmp.ne.s32.totalorder %s101, %s102
      %p114 = scmp.eq.s32.totalorder %s29, 1
      %p115 = por %p113, %p114
      %p117 = scmp.ne.s32.totalorder %s102, %s116
      %p118 = scmp.eq.s32.totalorder %s29, 0
      %p119 = por %p117, %p118
      %s121 = sadd.s32 %s120, 1
      %p124 = scmp.eq.s32.totalorder %s23, 1
      %p125 = scmp.ne.s32.totalorder %s120, %s122
      %p126 = scmp.eq.s32.totalorder %s23, 0
      %p127 = por %p125, %p126
      %p128 = scmp.ne.s32.totalorder %s120, %s122
      %p129 = scmp.eq.s32.totalorder %s28, 1
      %p130 = por %p128, %p129
      %p131 = scmp.ne.s32.totalorder %s122, %s123
      %p132 = scmp.eq.s32.totalorder %s28, 0
      %p133 = por %p131, %p132
      %p134 = scmp.ne.s32.totalorder %s122, %s123
      %p135 = scmp.eq.s32.totalorder %s29, 1
      %p136 = por %p134, %p135
      %p138 = scmp.ne.s32.totalorder %s123, %s137
      %p139 = scmp.eq.s32.totalorder %s29, 0
      %p140 = por %p138, %p139
      %s142 = sadd.s32 %s141, 1
      %p145 = scmp.eq.s32.totalorder %s23, 1
      %p146 = scmp.ne.s32.totalorder %s141, %s143
      %p147 = scmp.eq.s32.totalorder %s23, 0
      %p148 = por %p146, %p147
      %p149 = scmp.ne.s32.totalorder %s141, %s143
      %p150 = scmp.eq.s32.totalorder %s28, 1
      %p151 = por %p149, %p150
      %p152 = scmp.ne.s32.totalorder %s143, %s144
      %p153 = scmp.eq.s32.totalorder %s28, 0
      %p154 = por %p152, %p153
      %p155 = scmp.ne.s32.totalorder %s143, %s144
      %p156 = scmp.eq.s32.totalorder %s29, 1
      %p157 = por %p155, %p156
      %p159 = scmp.ne.s32.totalorder %s144, %s158
      %p160 = scmp.eq.s32.totalorder %s29, 0
      %p161 = por %p159, %p160
      %s163 = sadd.s32 %s162, 1
      %p166 = scmp.eq.s32.totalorder %s23, 1
      %p167 = scmp.ne.s32.totalorder %s162, %s164
      %p168 = scmp.eq.s32.totalorder %s23, 0
      %p169 = por %p167, %p168
      %p170 = scmp.ne.s32.totalorder %s162, %s164
      %p171 = scmp.eq.s32.totalorder %s28, 1
      %p172 = por %p170, %p171
      %p173 = scmp.ne.s32.totalorder %s164, %s165
      %p174 = scmp.eq.s32.totalorder %s28, 0
      %p175 = por %p173, %p174
      %p176 = scmp.ne.s32.totalorder %s164, %s165
      %p177 = scmp.eq.s32.totalorder %s29, 1
      %p178 = por %p176, %p177
      %p180 = scmp.ne.s32.totalorder %s165, %s179
      %p181 = scmp.eq.s32.totalorder %s29, 0
      %p182 = por %p180, %p181
      %s184 = sadd.s32 %s183, 1
      %p187 = scmp.eq.s32.totalorder %s23, 1
      %p188 = scmp.ne.s32.totalorder %s183, %s185
      %p189 = scmp.eq.s32.totalorder %s23, 0
      %p190 = por %p188, %p189
      %p191 = scmp.ne.s32.totalorder %s183, %s185
      %p192 = scmp.eq.s32.totalorder %s28, 1
      %p193 = por %p191, %p192
      %p194 = scmp.ne.s32.totalorder %s185, %s186
      %p195 = scmp.eq.s32.totalorder %s28, 0
      %p196 = por %p194, %p195
      %p197 = scmp.ne.s32.totalorder %s185, %s186
      %p198 = scmp.eq.s32.totalorder %s29, 1
      %p199 = por %p197, %p198
      %p201 = scmp.ne.s32.totalorder %s186, %s200
      %p202 = scmp.eq.s32.totalorder %s29, 0
      %p203 = por %p201, %p202
      %s204 = ssub.s32 %s23, %s30
      %p205 = scmp.eq.s32.totalorder %s204, 0
      %s207 = sadd.s32 %s206, 1
      %s208 = scalar_select %p205, %s206, %s207
      %p211 = pneg %p205
      %p212 = scmp.eq.s32.totalorder %s23, 1
      %p213 = por %p211, %p212
      %p214 = scmp.ne.s32.totalorder %s206, %s209
      %p215 = scmp.eq.s32.totalorder %s23, 0
      %p216 = por %p214, %p215
      %p217 = scmp.ne.s32.totalorder %s206, %s209
      %p218 = scmp.eq.s32.totalorder %s28, 1
      %p219 = por %p217, %p218
      %p220 = scmp.ne.s32.totalorder %s209, %s210
      %p221 = scmp.eq.s32.totalorder %s28, 0
      %p222 = por %p220, %p221
      %p223 = scmp.ne.s32.totalorder %s209, %s210
      %p224 = scmp.eq.s32.totalorder %s29, 1
      %p225 = por %p223, %p224
      %p227 = scmp.ne.s32.totalorder %s210, %s226
      %p228 = scmp.eq.s32.totalorder %s29, 0
      %p229 = por %p227, %p228
      %p230 = scmp.le.s32.totalorder 1, %s23
      %p231 = scmp.lt.s32.totalorder %s23, 3
      %p232 = pnand %p230, %p231
      %p233 = pneg %p232
      // Predicated region
      $region9: #{tpu_custom_call.1} parent=5 // pred_check
        _
      $region10: #{tpu_custom_call.1} parent=5 // pred_check_branch
        %235 = sbr.rel (%p232) target = $region12
      $region11: #{tpu_custom_call.1} parent=5 // pred_region
        %s236 = ssub.s32 %s23, 1
        // Predicated region
        $region13: #{tpu_custom_call.1} parent=11 // pred_check
          %p237 = pneg %p70
        $region14: #{tpu_custom_call.1} parent=11 // pred_check_branch
          %239 = sbr.rel (%p237) target = $region16
        $region15: #{tpu_custom_call.1} parent=11 // pred_region
          %s241 = ssub.s32 2560, 2560
          %242 = vsyncadd [#allocation7], %s241
          %s243 = sshll.u32 [#allocation6], 4
          %s244 = int_to_ptr.vmem [resolvable:$true] %s243
          %249 = dma.hbm_to_vmem [thread:$0]  %s1, 2560, %s244, [#allocation7], 128, 128, 8
        $region16: #{tpu_custom_call.1} parent=11 // pred_fallthru
          _
        // Predicated region
        $region17: #{tpu_custom_call.1} parent=11 // pred_check
          %p250 = pneg %p91
        $region18: #{tpu_custom_call.1} parent=11 // pred_check_branch
          %252 = sbr.rel (%p250) target = $region20
        $region19: #{tpu_custom_call.1} parent=11 // pred_region
          _
        $region20: #{tpu_custom_call.1} parent=11 // pred_fallthru
          _
        // Predicated region
        $region21: #{tpu_custom_call.1} parent=11 // pred_check
          %p253 = pneg %p112
        $region22: #{tpu_custom_call.1} parent=11 // pred_check_branch
          %255 = sbr.rel (%p253) target = $region24
        $region23: #{tpu_custom_call.1} parent=11 // pred_region
          _
        $region24: #{tpu_custom_call.1} parent=11 // pred_fallthru
          _
        // Predicated region
        $region25: #{tpu_custom_call.1} parent=11 // pred_check
          %p256 = pneg %p133
        $region26: #{tpu_custom_call.1} parent=11 // pred_check_branch
          %258 = sbr.rel (%p256) target = $region28
        $region27: #{tpu_custom_call.1} parent=11 // pred_region
          _
        $region28: #{tpu_custom_call.1} parent=11 // pred_fallthru
          _
        // Predicated region
        $region29: #{tpu_custom_call.1} parent=11 // pred_check
          %p259 = pneg %p154
        $region30: #{tpu_custom_call.1} parent=11 // pred_check_branch
          %261 = sbr.rel (%p259) target = $region32
        $region31: #{tpu_custom_call.1} parent=11 // pred_region
          _
        $region32: #{tpu_custom_call.1} parent=11 // pred_fallthru
          _
        // Predicated region
        $region33: #{tpu_custom_call.1} parent=11 // pred_check
          %p262 = pneg %p175
        $region34: #{tpu_custom_call.1} parent=11 // pred_check_branch
          %264 = sbr.rel (%p262) target = $region36
        $region35: #{tpu_custom_call.1} parent=11 // pred_region
          _
        $region36: #{tpu_custom_call.1} parent=11 // pred_fallthru
          _
        // Predicated region
        $region37: #{tpu_custom_call.1} parent=11 // pred_check
          %p265 = pneg %p196
        $region38: #{tpu_custom_call.1} parent=11 // pred_check_branch
          %267 = sbr.rel (%p265) target = $region40
        $region39: #{tpu_custom_call.1} parent=11 // pred_region
          _
        $region40: #{tpu_custom_call.1} parent=11 // pred_fallthru
          _
      $region12: #{tpu_custom_call.1} parent=5 // pred_fallthru
        _
      %p268 = scmp.lt.s32.totalorder %s23, 2
      // Predicated region
      $region41: #{tpu_custom_call.1} parent=5 // pred_check
        %p269 = pneg %p268
      $region42: #{tpu_custom_call.1} parent=5 // pred_check_branch
        %271 = sbr.rel (%p269) target = $region44
      $region43: #{tpu_custom_call.1} parent=5 // pred_region
        // Predicated region
        $region45: #{tpu_custom_call.1} parent=43 // pred_check
          %p272 = pneg %p43
        $region46: #{tpu_custom_call.1} parent=43 // pred_check_branch
          %274 = sbr.rel (%p272) target = $region48
        $region47: #{tpu_custom_call.1} parent=43 // pred_region
          %s275 = sand.u32 %s33, 1
          %s276 = scalar_lea.sflag [#allocation4], %s275
          %s277 = sand.u32 %s33, 1
          %s278 = smul.addr %s277, 4
          %s279 = scalar_lea.vmem [#allocation3], %s278
          %s281 = ssub.s32 64, 64
          %282 = vsyncadd %s276, %s281
          %s283 = smul.addr %s23, 64
          %s284 = scalar_lea.hbm %s0, %s283
          %s286 = sshll.u32 %s279, 4
          %s287 = int_to_ptr.vmem [resolvable:$true] %s286
          %289 = dma.hbm_to_vmem [thread:$0]  %s284, 64, %s287, %s276
        $region48: #{tpu_custom_call.1} parent=43 // pred_fallthru
          _
      $region44: #{tpu_custom_call.1} parent=5 // pred_fallthru
        _
      %p290 = scmp.le.s32.totalorder 1, %s23
      %p291 = scmp.lt.s32.totalorder %s23, 3
      %p292 = pnand %p290, %p291
      %p293 = pneg %p292
      // Predicated region
      $region49: #{tpu_custom_call.1} parent=5 // pred_check
        _
      $region50: #{tpu_custom_call.1} parent=5 // pred_check_branch
        %295 = sbr.rel (%p292) target = $region52
      $region51: #{tpu_custom_call.1} parent=5 // pred_region
        %s296 = ssub.s32 %s23, 1
        %s297 = sand.u32 %s36, 1
        %s298 = scalar_lea.sflag [#allocation4], %s297
        %s299 = sand.u32 %s36, 1
        %s300 = smul.addr %s299, 4
        %s301 = scalar_lea.vmem [#allocation3], %s300
        // Predicated region
        $region53: #{tpu_custom_call.1} parent=51 // pred_check
          %p302 = pneg %p49
        $region54: #{tpu_custom_call.1} parent=51 // pred_check_branch
          %304 = sbr.rel (%p302) target = $region56
        $region55: #{tpu_custom_call.1} parent=51 // pred_region
          %305 = dma.done %s298, 64
        $region56: #{tpu_custom_call.1} parent=51 // pred_fallthru
          _
        // Predicated region
        $region57: #{tpu_custom_call.1} parent=51 // pred_check
          %p306 = pneg %p70
        $region58: #{tpu_custom_call.1} parent=51 // pred_check_branch
          %308 = sbr.rel (%p306) target = $region60
        $region59: #{tpu_custom_call.1} parent=51 // pred_region
          %309 = dma.done [#allocation7], 2560
        $region60: #{tpu_custom_call.1} parent=51 // pred_fallthru
          _
        %s310 = sand.u32 %s36, 1
        %s311 = scalar_lea.sflag [#allocation4], %s310
        %s312 = sand.u32 %s36, 1
        %s313 = smul.addr %s312, 4
        %s314 = scalar_lea.vmem [#allocation3], %s313
        %p315 = pneg %p49
        %p316 = pneg %p46
        %p317 = pneg %p70
        %p318 = pneg %p67
        %p319 = pneg %p91
        %p320 = pneg %p88
        %p321 = pneg %p112
        %p322 = pneg %p109
        %p323 = pneg %p133
        %p324 = pneg %p130
        %p325 = pneg %p154
        %p326 = pneg %p151
        %p327 = pneg %p175
        %p328 = pneg %p172
        %p329 = pneg %p196
        %p330 = pneg %p193
        %p331 = pneg %p222
        %p332 = pneg %p219
        %s333 = sand.u32 %s209, 1
        %s334 = scalar_lea.sflag [#allocation5], %s333
        %s335 = sand.u32 %s209, 1
        %s336 = scalar_lea.vmem [#allocation8], %s335
        %v337 = vlaneseq
        %v338 = vshrl.u32 %v337, 7
        %v339 = vadd.s32 %v338, 8
        %v340 = vadd.s32 %v338, 16
        %v341 = vadd.s32 %v338, 24
        %v342 = vadd.s32 %v338, 32
        %v343 = vadd.s32 %v338, 40
        %v344 = vadd.s32 %v338, 48
        %v345 = vadd.s32 %v338, 56
        %v346 = vadd.s32 %v338, 64
        %v347 = vadd.s32 %v338, 72
        %v348 = vadd.s32 %v338, 80
        %v349 = vadd.s32 %v338, 88
        %v350 = vadd.s32 %v338, 96
        %v351 = vadd.s32 %v338, 104
        %v352 = vadd.s32 %v338, 112
        %v353 = vadd.s32 %v338, 120
        %v354 = vld [vmem:[%s301] sm:$0x1]
        %v355 = vlaneseq
        %v356 = vshrl.u32 %v355, 7
        %v357 = vsub.s32 0, %v356
        %v358 = vrot.slane %v354, %v357
        %vm359 = vcmp.eq.s32.totalorder %v338, %v358
        %vm360 = vcmp.eq.s32.totalorder %v339, %v358
        %vm361 = vcmp.eq.s32.totalorder %v340, %v358
        %vm362 = vcmp.eq.s32.totalorder %v341, %v358
        %vm363 = vcmp.eq.s32.totalorder %v342, %v358
        %vm364 = vcmp.eq.s32.totalorder %v343, %v358
        %vm365 = vcmp.eq.s32.totalorder %v344, %v358
        %vm366 = vcmp.eq.s32.totalorder %v345, %v358
        %vm367 = vcmp.eq.s32.totalorder %v346, %v358
        %vm368 = vcmp.eq.s32.totalorder %v347, %v358
        %vm369 = vcmp.eq.s32.totalorder %v348, %v358
        %vm370 = vcmp.eq.s32.totalorder %v349, %v358
        %vm371 = vcmp.eq.s32.totalorder %v350, %v358
        %vm372 = vcmp.eq.s32.totalorder %v351, %v358
        %vm373 = vcmp.eq.s32.totalorder %v352, %v358
        %vm374 = vcmp.eq.s32.totalorder %v353, %v358
        %v375 = vsel %vm359, 1, 0
        %v376 = vsel %vm360, 1, 0
        %v377 = vsel %vm361, 1, 0
        %v378 = vsel %vm362, 1, 0
        %v379 = vsel %vm363, 1, 0
        %v380 = vsel %vm364, 1, 0
        %v381 = vsel %vm365, 1, 0
        %v382 = vsel %vm366, 1, 0
        %v383 = vsel %vm367, 1, 0
        %v384 = vsel %vm368, 1, 0
        %v385 = vsel %vm369, 1, 0
        %v386 = vsel %vm370, 1, 0
        %v387 = vsel %vm371, 1, 0
        %v388 = vsel %vm372, 1, 0
        %v389 = vsel %vm373, 1, 0
        %v390 = vsel %vm374, 1, 0
        %v391 = vcvt.s32.f32 %v375
        %v392 = vcvt.s32.f32 %v376
        %v393 = vcvt.s32.f32 %v377
        %v394 = vcvt.s32.f32 %v378
        %v395 = vcvt.s32.f32 %v379
        %v396 = vcvt.s32.f32 %v380
        %v397 = vcvt.s32.f32 %v381
        %v398 = vcvt.s32.f32 %v382
        %v399 = vcvt.s32.f32 %v383
        %v400 = vcvt.s32.f32 %v384
        %v401 = vcvt.s32.f32 %v385
        %v402 = vcvt.s32.f32 %v386
        %v403 = vcvt.s32.f32 %v387
        %v404 = vcvt.s32.f32 %v388
        %v405 = vcvt.s32.f32 %v389
        %v406 = vcvt.s32.f32 %v390
        %v407 = vld [vmem:[#allocation6] sm:$0xff]
        %v408 = vld [vmem:[#allocation6 + $0x8] sm:$0xff]
        %v409 = vld [vmem:[#allocation6 + $0x10] sm:$0xff]
        %v410 = vld [vmem:[#allocation6 + $0x18] sm:$0xff]
        %v411 = vld [vmem:[#allocation6 + $0x20] sm:$0xff]
        %412 = vmatprep.subr.mxu0 0.0
        %413 = vmatpush1.msra.mxu0 %v406
        %414 = vmatprep.subr.mxu0 0.0
        %415 = vmatpush1.msra.mxu0 %v405
        %416 = vmatprep.subr.mxu0 0.0
        %417 = vmatpush1.msra.mxu0 %v404
        %418 = vmatprep.subr.mxu0 0.0
        %419 = vmatpush1.msra.mxu0 %v403
        %420 = vmatprep.subr.mxu0 0.0
        %421 = vmatpush1.msra.mxu0 %v402
        %422 = vmatprep.subr.mxu0 0.0
        %423 = vmatpush1.msra.mxu0 %v401
        %424 = vmatprep.subr.mxu0 0.0
        %425 = vmatpush1.msra.mxu0 %v400
        %426 = vmatprep.subr.mxu0 0.0
        %427 = vmatpush1.msra.mxu0 %v399
        %428 = vmatprep.subr.mxu0 0.0
        %429 = vmatpush1.msra.mxu0 %v398
        %430 = vmatprep.subr.mxu0 0.0
        %431 = vmatpush1.msra.mxu0 %v397
        %432 = vmatprep.subr.mxu0 0.0
        %433 = vmatpush1.msra.mxu0 %v396
        %434 = vmatprep.subr.mxu0 0.0
        %435 = vmatpush1.msra.mxu0 %v395
        %436 = vmatprep.subr.mxu0 0.0
        %437 = vmatpush1.msra.mxu0 %v394
        %438 = vmatprep.subr.mxu0 0.0
        %439 = vmatpush1.msra.mxu0 %v393
        %440 = vmatprep.subr.mxu0 0.0
        %441 = vmatpush1.msra.mxu0 %v392
        %442 = vmatprep.subr.mxu0 0.0
        %443 = vmatpush1.msra.mxu0 %v391
        %444 = vmatprep.subr.mxu0 0.0
        %445 = vmatpush2.msra.mxu0 0.0
        %446 = vmatprep.subr.mxu0 0.0
        %447 = vmatpush2.msra.mxu0 0.0
        %448 = vmatprep.subr.mxu0 0.0
        %449 = vmatpush2.msra.mxu0 0.0
        %450 = vmatprep.subr.mxu0 0.0
        %451 = vmatpush2.msra.mxu0 0.0
        %452 = vmatprep.subr.mxu0 0.0
        %453 = vmatpush2.msra.mxu0 0.0
        %454 = vmatprep.subr.mxu0 0.0
        %455 = vmatpush2.msra.mxu0 0.0
        %456 = vmatprep.subr.mxu0 0.0
        %457 = vmatpush2.msra.mxu0 0.0
        %458 = vmatprep.subr.mxu0 0.0
        %459 = vmatpush2.msra.mxu0 0.0
        %460 = vmatprep.subr.mxu0 0.0
        %461 = vmatpush2.msra.mxu0 0.0
        %462 = vmatprep.subr.mxu0 0.0
        %463 = vmatpush2.msra.mxu0 0.0
        %464 = vmatprep.subr.mxu0 0.0
        %465 = vmatpush2.msra.mxu0 0.0
        %466 = vmatprep.subr.mxu0 0.0
        %467 = vmatpush2.msra.mxu0 0.0
        %468 = vmatprep.subr.mxu0 0.0
        %469 = vmatpush2.msra.mxu0 0.0
        %470 = vmatprep.subr.mxu0 0.0
        %471 = vmatpush2.msra.mxu0 0.0
        %472 = vmatprep.subr.mxu0 0.0
        %473 = vmatpush2.msra.mxu0 0.0
        %474 = vmatprep.subr.mxu0 0.0
        %475 = vmatpush2.msra.mxu0 0.0
        %476 = vmatprep.mubr.f32.mxu0 0.0
        %477 = vmatmul.mubr.f32.gmra.mxu0 %v407
        %v478 = vpop.f32.mrf.mxu0
        %v479 = vadd.f32 0.0, %v478
        %v480 = vpop.f32.mrf.mxu0
        %481 = vmatprep.mubr.f32.mxu0 0.0
        %482 = vmatmul.mubr.f32.gmra.mxu0 %v408
        %v483 = vpop.f32.mrf.mxu0
        %v484 = vadd.f32 0.0, %v483
        %v485 = vpop.f32.mrf.mxu0
        %486 = vmatprep.mubr.f32.mxu0 0.0
        %487 = vmatmul.mubr.f32.gmra.mxu0 %v409
        %v488 = vpop.f32.mrf.mxu0
        %v489 = vadd.f32 0.0, %v488
        %v490 = vpop.f32.mrf.mxu0
        %491 = vmatprep.mubr.f32.mxu0 0.0
        %492 = vmatmul.mubr.f32.gmra.mxu0 %v410
        %v493 = vpop.f32.mrf.mxu0
        %v494 = vadd.f32 0.0, %v493
        %v495 = vpop.f32.mrf.mxu0
        %496 = vmatprep.mubr.f32.mxu0 0.0
        %497 = vmatmul.mubr.f32.gmra.mxu0 %v411
        %v498 = vpop.f32.mrf.mxu0
        %v499 = vadd.f32 0.0, %v498
        %v500 = vpop.f32.mrf.mxu0
        %501 = vdwg.mxu0
        %v502 = vld [vmem:[%s301 + $0x1] sm:$0x1]
        %v503 = vlaneseq
        %v504 = vshrl.u32 %v503, 7
        %v505 = vsub.s32 0, %v504
        %v506 = vrot.slane %v502, %v505
        %vm507 = vcmp.eq.s32.totalorder %v338, %v506
        %vm508 = vcmp.eq.s32.totalorder %v339, %v506
        %vm509 = vcmp.eq.s32.totalorder %v340, %v506
        %vm510 = vcmp.eq.s32.totalorder %v341, %v506
        %vm511 = vcmp.eq.s32.totalorder %v342, %v506
        %vm512 = vcmp.eq.s32.totalorder %v343, %v506
        %vm513 = vcmp.eq.s32.totalorder %v344, %v506
        %vm514 = vcmp.eq.s32.totalorder %v345, %v506
        %vm515 = vcmp.eq.s32.totalorder %v346, %v506
        %vm516 = vcmp.eq.s32.totalorder %v347, %v506
        %vm517 = vcmp.eq.s32.totalorder %v348, %v506
        %vm518 = vcmp.eq.s32.totalorder %v349, %v506
        %vm519 = vcmp.eq.s32.totalorder %v350, %v506
        %vm520 = vcmp.eq.s32.totalorder %v351, %v506
        %vm521 = vcmp.eq.s32.totalorder %v352, %v506
        %vm522 = vcmp.eq.s32.totalorder %v353, %v506
        %v523 = vsel %vm507, 1, 0
        %v524 = vsel %vm508, 1, 0
        %v525 = vsel %vm509, 1, 0
        %v526 = vsel %vm510, 1, 0
        %v527 = vsel %vm511, 1, 0
        %v528 = vsel %vm512, 1, 0
        %v529 = vsel %vm513, 1, 0
        %v530 = vsel %vm514, 1, 0
        %v531 = vsel %vm515, 1, 0
        %v532 = vsel %vm516, 1, 0
        %v533 = vsel %vm517, 1, 0
        %v534 = vsel %vm518, 1, 0
        %v535 = vsel %vm519, 1, 0
        %v536 = vsel %vm520, 1, 0
        %v537 = vsel %vm521, 1, 0
        %v538 = vsel %vm522, 1, 0
        %v539 = vcvt.s32.f32 %v523
        %v540 = vcvt.s32.f32 %v524
        %v541 = vcvt.s32.f32 %v525
        %v542 = vcvt.s32.f32 %v526
        %v543 = vcvt.s32.f32 %v527
        %v544 = vcvt.s32.f32 %v528
        %v545 = vcvt.s32.f32 %v529
        %v546 = vcvt.s32.f32 %v530
        %v547 = vcvt.s32.f32 %v531
        %v548 = vcvt.s32.f32 %v532
        %v549 = vcvt.s32.f32 %v533
        %v550 = vcvt.s32.f32 %v534
        %v551 = vcvt.s32.f32 %v535
        %v552 = vcvt.s32.f32 %v536
        %v553 = vcvt.s32.f32 %v537
        %v554 = vcvt.s32.f32 %v538
        %s555 = scalar_lea.vmem [#allocation6], 40
        %v556 = vld [vmem:[%s555] sm:$0xff]
        %v557 = vld [vmem:[%s555 + $0x8] sm:$0xff]
        %v558 = vld [vmem:[%s555 + $0x10] sm:$0xff]
        %v559 = vld [vmem:[%s555 + $0x18] sm:$0xff]
        %v560 = vld [vmem:[%s555 + $0x20] sm:$0xff]
        %561 = vmatprep.subr.mxu0 0.0
        %562 = vmatpush1.msra.mxu0 %v554
        %563 = vmatprep.subr.mxu0 0.0
        %564 = vmatpush1.msra.mxu0 %v553
        %565 = vmatprep.subr.mxu0 0.0
        %566 = vmatpush1.msra.mxu0 %v552
        %567 = vmatprep.subr.mxu0 0.0
        %568 = vmatpush1.msra.mxu0 %v551
        %569 = vmatprep.subr.mxu0 0.0
        %570 = vmatpush1.msra.mxu0 %v550
        %571 = vmatprep.subr.mxu0 0.0
        %572 = vmatpush1.msra.mxu0 %v549
        %573 = vmatprep.subr.mxu0 0.0
        %574 = vmatpush1.msra.mxu0 %v548
        %575 = vmatprep.subr.mxu0 0.0
        %576 = vmatpush1.msra.mxu0 %v547
        %577 = vmatprep.subr.mxu0 0.0
        %578 = vmatpush1.msra.mxu0 %v546
        %579 = vmatprep.subr.mxu0 0.0
        %580 = vmatpush1.msra.mxu0 %v545
        %581 = vmatprep.subr.mxu0 0.0
        %582 = vmatpush1.msra.mxu0 %v544
        %583 = vmatprep.subr.mxu0 0.0
        %584 = vmatpush1.msra.mxu0 %v543
        %585 = vmatprep.subr.mxu0 0.0
        %586 = vmatpush1.msra.mxu0 %v542
        %587 = vmatprep.subr.mxu0 0.0
        %588 = vmatpush1.msra.mxu0 %v541
        %589 = vmatprep.subr.mxu0 0.0
        %590 = vmatpush1.msra.mxu0 %v540
        %591 = vmatprep.subr.mxu0 0.0
        %592 = vmatpush1.msra.mxu0 %v539
        %593 = vmatprep.subr.mxu0 0.0
        %594 = vmatpush2.msra.mxu0 0.0
        %595 = vmatprep.subr.mxu0 0.0
        %596 = vmatpush2.msra.mxu0 0.0
        %597 = vmatprep.subr.mxu0 0.0
        %598 = vmatpush2.msra.mxu0 0.0
        %599 = vmatprep.subr.mxu0 0.0
        %600 = vmatpush2.msra.mxu0 0.0
        %601 = vmatprep.subr.mxu0 0.0
        %602 = vmatpush2.msra.mxu0 0.0
        %603 = vmatprep.subr.mxu0 0.0
        %604 = vmatpush2.msra.mxu0 0.0
        %605 = vmatprep.subr.mxu0 0.0
        %606 = vmatpush2.msra.mxu0 0.0
        %607 = vmatprep.subr.mxu0 0.0
        %608 = vmatpush2.msra.mxu0 0.0
        %609 = vmatprep.subr.mxu0 0.0
        %610 = vmatpush2.msra.mxu0 0.0
        %611 = vmatprep.subr.mxu0 0.0
        %612 = vmatpush2.msra.mxu0 0.0
        %613 = vmatprep.subr.mxu0 0.0
        %614 = vmatpush2.msra.mxu0 0.0
        %615 = vmatprep.subr.mxu0 0.0
        %616 = vmatpush2.msra.mxu0 0.0
        %617 = vmatprep.subr.mxu0 0.0
        %618 = vmatpush2.msra.mxu0 0.0
        %619 = vmatprep.subr.mxu0 0.0
        %620 = vmatpush2.msra.mxu0 0.0
        %621 = vmatprep.subr.mxu0 0.0
        %622 = vmatpush2.msra.mxu0 0.0
        %623 = vmatprep.subr.mxu0 0.0
        %624 = vmatpush2.msra.mxu0 0.0
        %625 = vmatprep.mubr.f32.mxu0 0.0
        %626 = vmatmul.mubr.f32.gmra.mxu0 %v556
        %v627 = vpop.f32.mrf.mxu0
        %v628 = vadd.f32 0.0, %v627
        %v629 = vpop.f32.mrf.mxu0
        %630 = vmatprep.mubr.f32.mxu0 0.0
        %631 = vmatmul.mubr.f32.gmra.mxu0 %v557
        %v632 = vpop.f32.mrf.mxu0
        %v633 = vadd.f32 0.0, %v632
        %v634 = vpop.f32.mrf.mxu0
        %635 = vmatprep.mubr.f32.mxu0 0.0
        %636 = vmatmul.mubr.f32.gmra.mxu0 %v558
        %v637 = vpop.f32.mrf.mxu0
        %v638 = vadd.f32 0.0, %v637
        %v639 = vpop.f32.mrf.mxu0
        %640 = vmatprep.mubr.f32.mxu0 0.0
        %641 = vmatmul.mubr.f32.gmra.mxu0 %v559
        %v642 = vpop.f32.mrf.mxu0
        %v643 = vadd.f32 0.0, %v642
        %v644 = vpop.f32.mrf.mxu0
        %645 = vmatprep.mubr.f32.mxu0 0.0
        %646 = vmatmul.mubr.f32.gmra.mxu0 %v560
        %v647 = vpop.f32.mrf.mxu0
        %v648 = vadd.f32 0.0, %v647
        %v649 = vpop.f32.mrf.mxu0
        %650 = vdwg.mxu0
        %v651 = vadd.f32 %v484, %v633
        %v652 = vadd.f32 %v489, %v638
        %v653 = vadd.f32 %v494, %v643
        %v654 = vadd.f32 %v499, %v648
        %v655 = vld [vmem:[%s301 + $0x2] sm:$0x1]
        %v656 = vlaneseq
        %v657 = vshrl.u32 %v656, 7
        %v658 = vsub.s32 0, %v657
        %v659 = vrot.slane %v655, %v658
        %vm660 = vcmp.eq.s32.totalorder %v338, %v659
        %vm661 = vcmp.eq.s32.totalorder %v339, %v659
        %vm662 = vcmp.eq.s32.totalorder %v340, %v659
        %vm663 = vcmp.eq.s32.totalorder %v341, %v659
        %vm664 = vcmp.eq.s32.totalorder %v342, %v659
        %vm665 = vcmp.eq.s32.totalorder %v343, %v659
        %vm666 = vcmp.eq.s32.totalorder %v344, %v659
        %vm667 = vcmp.eq.s32.totalorder %v345, %v659
        %vm668 = vcmp.eq.s32.totalorder %v346, %v659
        %vm669 = vcmp.eq.s32.totalorder %v347, %v659
        %vm670 = vcmp.eq.s32.totalorder %v348, %v659
        %vm671 = vcmp.eq.s32.totalorder %v349, %v659
        %vm672 = vcmp.eq.s32.totalorder %v350, %v659
        %vm673 = vcmp.eq.s32.totalorder %v351, %v659
        %vm674 = vcmp.eq.s32.totalorder %v352, %v659
        %vm675 = vcmp.eq.s32.totalorder %v353, %v659
        %v676 = vsel %vm660, 1, 0
        %v677 = vsel %vm661, 1, 0
        %v678 = vsel %vm662, 1, 0
        %v679 = vsel %vm663, 1, 0
        %v680 = vsel %vm664, 1, 0
        %v681 = vsel %vm665, 1, 0
        %v682 = vsel %vm666, 1, 0
        %v683 = vsel %vm667, 1, 0
        %v684 = vsel %vm668, 1, 0
        %v685 = vsel %vm669, 1, 0
        %v686 = vsel %vm670, 1, 0
        %v687 = vsel %vm671, 1, 0
        %v688 = vsel %vm672, 1, 0
        %v689 = vsel %vm673, 1, 0
        %v690 = vsel %vm674, 1, 0
        %v691 = vsel %vm675, 1, 0
        %v692 = vcvt.s32.f32 %v676
        %v693 = vcvt.s32.f32 %v677
        %v694 = vcvt.s32.f32 %v678
        %v695 = vcvt.s32.f32 %v679
        %v696 = vcvt.s32.f32 %v680
        %v697 = vcvt.s32.f32 %v681
        %v698 = vcvt.s32.f32 %v682
        %v699 = vcvt.s32.f32 %v683
        %v700 = vcvt.s32.f32 %v684
        %v701 = vcvt.s32.f32 %v685
        %v702 = vcvt.s32.f32 %v686
        %v703 = vcvt.s32.f32 %v687
        %v704 = vcvt.s32.f32 %v688
        %v705 = vcvt.s32.f32 %v689
        %v706 = vcvt.s32.f32 %v690
        %v707 = vcvt.s32.f32 %v691
        %s708 = scalar_lea.vmem [#allocation6], 80
        %v709 = vld [vmem:[%s708] sm:$0xff]
        %v710 = vld [vmem:[%s708 + $0x8] sm:$0xff]
        %v711 = vld [vmem:[%s708 + $0x10] sm:$0xff]
        %v712 = vld [vmem:[%s708 + $0x18] sm:$0xff]
        %v713 = vld [vmem:[%s708 + $0x20] sm:$0xff]
        %714 = vmatprep.subr.mxu0 0.0
        %715 = vmatpush1.msra.mxu0 %v707
        %716 = vmatprep.subr.mxu0 0.0
        %717 = vmatpush1.msra.mxu0 %v706
        %718 = vmatprep.subr.mxu0 0.0
        %719 = vmatpush1.msra.mxu0 %v705
        %720 = vmatprep.subr.mxu0 0.0
        %721 = vmatpush1.msra.mxu0 %v704
        %722 = vmatprep.subr.mxu0 0.0
        %723 = vmatpush1.msra.mxu0 %v703
        %724 = vmatprep.subr.mxu0 0.0
        %725 = vmatpush1.msra.mxu0 %v702
        %726 = vmatprep.subr.mxu0 0.0
        %727 = vmatpush1.msra.mxu0 %v701
        %728 = vmatprep.subr.mxu0 0.0
        %729 = vmatpush1.msra.mxu0 %v700
        %730 = vmatprep.subr.mxu0 0.0
        %731 = vmatpush1.msra.mxu0 %v699
        %732 = vmatprep.subr.mxu0 0.0
        %733 = vmatpush1.msra.mxu0 %v698
        %734 = vmatprep.subr.mxu0 0.0
        %735 = vmatpush1.msra.mxu0 %v697
        %736 = vmatprep.subr.mxu0 0.0
        %737 = vmatpush1.msra.mxu0 %v696
        %738 = vmatprep.subr.mxu0 0.0
        %739 = vmatpush1.msra.mxu0 %v695
        %740 = vmatprep.subr.mxu0 0.0
        %741 = vmatpush1.msra.mxu0 %v694
        %742 = vmatprep.subr.mxu0 0.0
        %743 = vmatpush1.msra.mxu0 %v693
        %744 = vmatprep.subr.mxu0 0.0
        %745 = vmatpush1.msra.mxu0 %v692
        %746 = vmatprep.subr.mxu0 0.0
        %747 = vmatpush2.msra.mxu0 0.0
        %748 = vmatprep.subr.mxu0 0.0
        %749 = vmatpush2.msra.mxu0 0.0
        %750 = vmatprep.subr.mxu0 0.0
        %751 = vmatpush2.msra.mxu0 0.0
        %752 = vmatprep.subr.mxu0 0.0
        %753 = vmatpush2.msra.mxu0 0.0
        %754 = vmatprep.subr.mxu0 0.0
        %755 = vmatpush2.msra.mxu0 0.0
        %756 = vmatprep.subr.mxu0 0.0
        %757 = vmatpush2.msra.mxu0 0.0
        %758 = vmatprep.subr.mxu0 0.0
        %759 = vmatpush2.msra.mxu0 0.0
        %760 = vmatprep.subr.mxu0 0.0
        %761 = vmatpush2.msra.mxu0 0.0
        %762 = vmatprep.subr.mxu0 0.0
        %763 = vmatpush2.msra.mxu0 0.0
        %764 = vmatprep.subr.mxu0 0.0
        %765 = vmatpush2.msra.mxu0 0.0
        %766 = vmatprep.subr.mxu0 0.0
        %767 = vmatpush2.msra.mxu0 0.0
        %768 = vmatprep.subr.mxu0 0.0
        %769 = vmatpush2.msra.mxu0 0.0
        %770 = vmatprep.subr.mxu0 0.0
        %771 = vmatpush2.msra.mxu0 0.0
        %772 = vmatprep.subr.mxu0 0.0
        %773 = vmatpush2.msra.mxu0 0.0
        %774 = vmatprep.subr.mxu0 0.0
        %775 = vmatpush2.msra.mxu0 0.0
        %776 = vmatprep.subr.mxu0 0.0
        %777 = vmatpush2.msra.mxu0 0.0
        %778 = vmatprep.mubr.f32.mxu0 0.0
        %779 = vmatmul.mubr.f32.gmra.mxu0 %v709
        %v780 = vpop.f32.mrf.mxu0
        %v781 = vadd.f32 0.0, %v780
        %v782 = vpop.f32.mrf.mxu0
        %783 = vmatprep.mubr.f32.mxu0 0.0
        %784 = vmatmul.mubr.f32.gmra.mxu0 %v710
        %v785 = vpop.f32.mrf.mxu0
        %v786 = vadd.f32 0.0, %v785
        %v787 = vpop.f32.mrf.mxu0
        %788 = vmatprep.mubr.f32.mxu0 0.0
        %789 = vmatmul.mubr.f32.gmra.mxu0 %v711
        %v790 = vpop.f32.mrf.mxu0
        %v791 = vadd.f32 0.0, %v790
        %v792 = vpop.f32.mrf.mxu0
        %793 = vmatprep.mubr.f32.mxu0 0.0
        %794 = vmatmul.mubr.f32.gmra.mxu0 %v712
        %v795 = vpop.f32.mrf.mxu0
        %v796 = vadd.f32 0.0, %v795
        %v797 = vpop.f32.mrf.mxu0
        %798 = vmatprep.mubr.f32.mxu0 0.0
        %799 = vmatmul.mubr.f32.gmra.mxu0 %v713
        %v800 = vpop.f32.mrf.mxu0
        %v801 = vadd.f32 0.0, %v800
        %v802 = vpop.f32.mrf.mxu0
        %803 = vdwg.mxu0
        %v804 = vadd.f32 %v651, %v786
        %v805 = vadd.f32 %v652, %v791
        %v806 = vadd.f32 %v653, %v796
        %v807 = vadd.f32 %v654, %v801
        %v808 = vld [vmem:[%s301 + $0x3] sm:$0x1]
        %v809 = vlaneseq
        %v810 = vshrl.u32 %v809, 7
        %v811 = vsub.s32 0, %v810
        %v812 = vrot.slane %v808, %v811
        %vm813 = vcmp.eq.s32.totalorder %v338, %v812
        %vm814 = vcmp.eq.s32.totalorder %v339, %v812
        %vm815 = vcmp.eq.s32.totalorder %v340, %v812
        %vm816 = vcmp.eq.s32.totalorder %v341, %v812
        %vm817 = vcmp.eq.s32.totalorder %v342, %v812
        %vm818 = vcmp.eq.s32.totalorder %v343, %v812
        %vm819 = vcmp.eq.s32.totalorder %v344, %v812
        %vm820 = vcmp.eq.s32.totalorder %v345, %v812
        %vm821 = vcmp.eq.s32.totalorder %v346, %v812
        %vm822 = vcmp.eq.s32.totalorder %v347, %v812
        %vm823 = vcmp.eq.s32.totalorder %v348, %v812
        %vm824 = vcmp.eq.s32.totalorder %v349, %v812
        %vm825 = vcmp.eq.s32.totalorder %v350, %v812
        %vm826 = vcmp.eq.s32.totalorder %v351, %v812
        %vm827 = vcmp.eq.s32.totalorder %v352, %v812
        %vm828 = vcmp.eq.s32.totalorder %v353, %v812
        %v829 = vsel %vm813, 1, 0
        %v830 = vsel %vm814, 1, 0
        %v831 = vsel %vm815, 1, 0
        %v832 = vsel %vm816, 1, 0
        %v833 = vsel %vm817, 1, 0
        %v834 = vsel %vm818, 1, 0
        %v835 = vsel %vm819, 1, 0
        %v836 = vsel %vm820, 1, 0
        %v837 = vsel %vm821, 1, 0
        %v838 = vsel %vm822, 1, 0
        %v839 = vsel %vm823, 1, 0
        %v840 = vsel %vm824, 1, 0
        %v841 = vsel %vm825, 1, 0
        %v842 = vsel %vm826, 1, 0
        %v843 = vsel %vm827, 1, 0
        %v844 = vsel %vm828, 1, 0
        %v845 = vcvt.s32.f32 %v829
        %v846 = vcvt.s32.f32 %v830
        %v847 = vcvt.s32.f32 %v831
        %v848 = vcvt.s32.f32 %v832
        %v849 = vcvt.s32.f32 %v833
        %v850 = vcvt.s32.f32 %v834
        %v851 = vcvt.s32.f32 %v835
        %v852 = vcvt.s32.f32 %v836
        %v853 = vcvt.s32.f32 %v837
        %v854 = vcvt.s32.f32 %v838
        %v855 = vcvt.s32.f32 %v839
        %v856 = vcvt.s32.f32 %v840
        %v857 = vcvt.s32.f32 %v841
        %v858 = vcvt.s32.f32 %v842
        %v859 = vcvt.s32.f32 %v843
        %v860 = vcvt.s32.f32 %v844
        %s861 = scalar_lea.vmem [#allocation6], 120
        %v862 = vld [vmem:[%s861] sm:$0xff]
        %v863 = vld [vmem:[%s861 + $0x8] sm:$0xff]
        %v864 = vld [vmem:[%s861 + $0x10] sm:$0xff]
        %v865 = vld [vmem:[%s861 + $0x18] sm:$0xff]
        %v866 = vld [vmem:[%s861 + $0x20] sm:$0xff]
        %867 = vmatprep.subr.mxu0 0.0
        %868 = vmatpush1.msra.mxu0 %v860
        %869 = vmatprep.subr.mxu0 0.0
        %870 = vmatpush1.msra.mxu0 %v859
        %871 = vmatprep.subr.mxu0 0.0
        %872 = vmatpush1.msra.mxu0 %v858
        %873 = vmatprep.subr.mxu0 0.0
        %874 = vmatpush1.msra.mxu0 %v857
        %875 = vmatprep.subr.mxu0 0.0
        %876 = vmatpush1.msra.mxu0 %v856
        %877 = vmatprep.subr.mxu0 0.0
        %878 = vmatpush1.msra.mxu0 %v855
        %879 = vmatprep.subr.mxu0 0.0
        %880 = vmatpush1.msra.mxu0 %v854
        %881 = vmatprep.subr.mxu0 0.0
        %882 = vmatpush1.msra.mxu0 %v853
        %883 = vmatprep.subr.mxu0 0.0
        %884 = vmatpush1.msra.mxu0 %v852
        %885 = vmatprep.subr.mxu0 0.0
        %886 = vmatpush1.msra.mxu0 %v851
        %887 = vmatprep.subr.mxu0 0.0
        %888 = vmatpush1.msra.mxu0 %v850
        %889 = vmatprep.subr.mxu0 0.0
        %890 = vmatpush1.msra.mxu0 %v849
        %891 = vmatprep.subr.mxu0 0.0
        %892 = vmatpush1.msra.mxu0 %v848
        %893 = vmatprep.subr.mxu0 0.0
        %894 = vmatpush1.msra.mxu0 %v847
        %895 = vmatprep.subr.mxu0 0.0
        %896 = vmatpush1.msra.mxu0 %v846
        %897 = vmatprep.subr.mxu0 0.0
        %898 = vmatpush1.msra.mxu0 %v845
        %899 = vmatprep.subr.mxu0 0.0
        %900 = vmatpush2.msra.mxu0 0.0
        %901 = vmatprep.subr.mxu0 0.0
        %902 = vmatpush2.msra.mxu0 0.0
        %903 = vmatprep.subr.mxu0 0.0
        %904 = vmatpush2.msra.mxu0 0.0
        %905 = vmatprep.subr.mxu0 0.0
        %906 = vmatpush2.msra.mxu0 0.0
        %907 = vmatprep.subr.mxu0 0.0
        %908 = vmatpush2.msra.mxu0 0.0
        %909 = vmatprep.subr.mxu0 0.0
        %910 = vmatpush2.msra.mxu0 0.0
        %911 = vmatprep.subr.mxu0 0.0
        %912 = vmatpush2.msra.mxu0 0.0
        %913 = vmatprep.subr.mxu0 0.0
        %914 = vmatpush2.msra.mxu0 0.0
        %915 = vmatprep.subr.mxu0 0.0
        %916 = vmatpush2.msra.mxu0 0.0
        %917 = vmatprep.subr.mxu0 0.0
        %918 = vmatpush2.msra.mxu0 0.0
        %919 = vmatprep.subr.mxu0 0.0
        %920 = vmatpush2.msra.mxu0 0.0
        %921 = vmatprep.subr.mxu0 0.0
        %922 = vmatpush2.msra.mxu0 0.0
        %923 = vmatprep.subr.mxu0 0.0
        %924 = vmatpush2.msra.mxu0 0.0
        %925 = vmatprep.subr.mxu0 0.0
        %926 = vmatpush2.msra.mxu0 0.0
        %927 = vmatprep.subr.mxu0 0.0
        %928 = vmatpush2.msra.mxu0 0.0
        %929 = vmatprep.subr.mxu0 0.0
        %930 = vmatpush2.msra.mxu0 0.0
        %931 = vmatprep.mubr.f32.mxu0 0.0
        %932 = vmatmul.mubr.f32.gmra.mxu0 %v862
        %v933 = vpop.f32.mrf.mxu0
        %v934 = vadd.f32 0.0, %v933
        %v935 = vpop.f32.mrf.mxu0
        %936 = vmatprep.mubr.f32.mxu0 0.0
        %937 = vmatmul.mubr.f32.gmra.mxu0 %v863
        %v938 = vpop.f32.mrf.mxu0
        %v939 = vadd.f32 0.0, %v938
        %v940 = vpop.f32.mrf.mxu0
        %941 = vmatprep.mubr.f32.mxu0 0.0
        %942 = vmatmul.mubr.f32.gmra.mxu0 %v864
        %v943 = vpop.f32.mrf.mxu0
        %v944 = vadd.f32 0.0, %v943
        %v945 = vpop.f32.mrf.mxu0
        %946 = vmatprep.mubr.f32.mxu0 0.0
        %947 = vmatmul.mubr.f32.gmra.mxu0 %v865
        %v948 = vpop.f32.mrf.mxu0
        %v949 = vadd.f32 0.0, %v948
        %v950 = vpop.f32.mrf.mxu0
        %951 = vmatprep.mubr.f32.mxu0 0.0
        %952 = vmatmul.mubr.f32.gmra.mxu0 %v866
        %v953 = vpop.f32.mrf.mxu0
        %v954 = vadd.f32 0.0, %v953
        %v955 = vpop.f32.mrf.mxu0
        %956 = vdwg.mxu0
        %v957 = vadd.f32 %v804, %v939
        %v958 = vadd.f32 %v805, %v944
        %v959 = vadd.f32 %v806, %v949
        %v960 = vadd.f32 %v807, %v954
        %v961 = vld [vmem:[%s2] sm:$0xff]
        %v962 = vld [vmem:[%s2 + $0x8] sm:$0xff]
        %v963 = vld [vmem:[%s2 + $0x10] sm:$0xff]
        %v964 = vld [vmem:[%s2 + $0x18] sm:$0xff]
        %v965 = vmul.f32 %v479, %v479
        %v966 = vmul.f32 %v628, %v628
        %v967 = vmul.f32 %v781, %v781
        %v968 = vmul.f32 %v934, %v934
        %vm969 = vcmask 261120
        %v971 = vsel %vm969, %v961, 0
        %v974 = vsel %vm969, %v962, 0
        %v977 = vsel %vm969, %v963, 0
        %v980 = vsel %vm969, %v964, 0
        %982 = vmatprep.subr.mxu0 0.0
        %983 = vmatpush1.msra.mxu0 0.0
        %984 = vmatprep.subr.mxu0 0.0
        %985 = vmatpush1.msra.mxu0 0.0
        %986 = vmatprep.subr.mxu0 0.0
        %987 = vmatpush1.msra.mxu0 0.0
        %988 = vmatprep.subr.mxu0 0.0
        %989 = vmatpush1.msra.mxu0 0.0
        %990 = vmatprep.subr.mxu0 0.0
        %991 = vmatpush1.msra.mxu0 0.0
        %992 = vmatprep.subr.mxu0 0.0
        %993 = vmatpush1.msra.mxu0 0.0
        %994 = vmatprep.subr.mxu0 0.0
        %995 = vmatpush1.msra.mxu0 0.0
        %996 = vmatprep.subr.mxu0 0.0
        %997 = vmatpush1.msra.mxu0 0.0
        %998 = vmatprep.subr.mxu0 0.0
        %999 = vmatpush1.msra.mxu0 0.0
        %1000 = vmatprep.subr.mxu0 0.0
        %1001 = vmatpush1.msra.mxu0 0.0
        %1002 = vmatprep.subr.mxu0 0.0
        %1003 = vmatpush1.msra.mxu0 0.0
        %1004 = vmatprep.subr.mxu0 0.0
        %1005 = vmatpush1.msra.mxu0 0.0
        %1006 = vmatprep.subr.mxu0 0.0
        %1007 = vmatpush1.msra.mxu0 %v968
        %1008 = vmatprep.subr.mxu0 0.0
        %1009 = vmatpush1.msra.mxu0 %v967
        %1010 = vmatprep.subr.mxu0 0.0
        %1011 = vmatpush1.msra.mxu0 %v966
        %1012 = vmatprep.subr.mxu0 0.0
        %1013 = vmatpush1.msra.mxu0 %v965
        %1014 = vmatprep.subr.mxu0 0.0
        %1015 = vmatpush2.msra.mxu0 0.0
        %1016 = vmatprep.subr.mxu0 0.0
        %1017 = vmatpush2.msra.mxu0 0.0
        %1018 = vmatprep.subr.mxu0 0.0
        %1019 = vmatpush2.msra.mxu0 0.0
        %1020 = vmatprep.subr.mxu0 0.0
        %1021 = vmatpush2.msra.mxu0 0.0
        %1022 = vmatprep.subr.mxu0 0.0
        %1023 = vmatpush2.msra.mxu0 0.0
        %1024 = vmatprep.subr.mxu0 0.0
        %1025 = vmatpush2.msra.mxu0 0.0
        %1026 = vmatprep.subr.mxu0 0.0
        %1027 = vmatpush2.msra.mxu0 0.0
        %1028 = vmatprep.subr.mxu0 0.0
        %1029 = vmatpush2.msra.mxu0 0.0
        %1030 = vmatprep.subr.mxu0 0.0
        %1031 = vmatpush2.msra.mxu0 0.0
        %1032 = vmatprep.subr.mxu0 0.0
        %1033 = vmatpush2.msra.mxu0 0.0
        %1034 = vmatprep.subr.mxu0 0.0
        %1035 = vmatpush2.msra.mxu0 0.0
        %1036 = vmatprep.subr.mxu0 0.0
        %1037 = vmatpush2.msra.mxu0 0.0
        %1038 = vmatprep.subr.mxu0 0.0
        %1039 = vmatpush2.msra.mxu0 0.0
        %1040 = vmatprep.subr.mxu0 0.0
        %1041 = vmatpush2.msra.mxu0 0.0
        %1042 = vmatprep.subr.mxu0 0.0
        %1043 = vmatpush2.msra.mxu0 0.0
        %1044 = vmatprep.subr.mxu0 0.0
        %1045 = vmatpush2.msra.mxu0 0.0
        %1046 = vmatprep.mubr.f32.mxu0 0.0
        %1047 = vmatmul.mubr.f32.gmra.mxu0 %v971
        %v1048 = vpop.f32.mrf.mxu0
        %v1049 = vadd.f32 %v957, %v1048
        %v1050 = vpop.f32.mrf.mxu0
        %1051 = vmatprep.mubr.f32.mxu0 0.0
        %1052 = vmatmul.mubr.f32.gmra.mxu0 %v974
        %v1053 = vpop.f32.mrf.mxu0
        %v1054 = vadd.f32 %v958, %v1053
        %v1055 = vpop.f32.mrf.mxu0
        %1056 = vmatprep.mubr.f32.mxu0 0.0
        %1057 = vmatmul.mubr.f32.gmra.mxu0 %v977
        %v1058 = vpop.f32.mrf.mxu0
        %v1059 = vadd.f32 %v959, %v1058
        %v1060 = vpop.f32.mrf.mxu0
        %1061 = vmatprep.mubr.f32.mxu0 0.0
        %1062 = vmatmul.mubr.f32.gmra.mxu0 %v980
        %v1063 = vpop.f32.mrf.mxu0
        %v1064 = vadd.f32 %v960, %v1063
        %v1065 = vpop.f32.mrf.mxu0
        %1066 = vdwg.mxu0
        %v1067 = vld [vmem:[%s3] sm:$0xff]
        %v1068 = vld [vmem:[%s3 + $0x8] sm:$0xff]
        %v1069 = vld [vmem:[%s3 + $0x10] sm:$0xff]
        %v1070 = vld [vmem:[%s3 + $0x18] sm:$0xff]
        %1072 = vset.pattern.permute.xlu0 0
        %1073 = vperm.xlu0 %1072, %v1067
        %v1074 = vpop.permute.xlu0 %1073
        %1077 = vset.pattern.permute.xlu0 0
        %1078 = vperm.xlu0 %1077, %v1068
        %v1079 = vpop.permute.xlu0 %1078
        %1082 = vset.pattern.permute.xlu0 0
        %1083 = vperm.xlu0 %1082, %v1069
        %v1084 = vpop.permute.xlu0 %1083
        %1087 = vset.pattern.permute.xlu0 0
        %1088 = vperm.xlu0 %1087, %v1070
        %v1089 = vpop.permute.xlu0 %1088
        %v1091 = vadd.f32 %v1049, %v1074
        %v1092 = vadd.f32 %v1054, %v1079
        %v1093 = vadd.f32 %v1059, %v1084
        %v1094 = vadd.f32 %v1064, %v1089
        %v1095 = vmax.f32 %v1091, 0.0
        %v1096 = vmax.f32 %v1092, 0.0
        %v1097 = vmax.f32 %v1093, 0.0
        %v1098 = vmax.f32 %v1094, 0.0
        %v1099 = vld [vmem:[%s4] sm:$0xff]
        %v1100 = vld [vmem:[%s4 + $0x8] sm:$0xff]
        %v1101 = vld [vmem:[%s5] sm:$0xff]
        %v1102 = vld [vmem:[%s5 + $0x8] sm:$0xff]
        %1104 = vset.pattern.permute.xlu0 0
        %1105 = vperm.xlu0 %1104, %v1101
        %v1106 = vpop.permute.xlu0 %1105
        %1109 = vset.pattern.permute.xlu0 0
        %1110 = vperm.xlu0 %1109, %v1102
        %v1111 = vpop.permute.xlu0 %1110
        %v1114 = vsel %vm969, %v1099, 0
        %v1117 = vsel %vm969, %v1100, 0
        %1119 = vmatprep.subr.mxu0 0.0
        %1120 = vmatpush1.msra.mxu0 0.0
        %1121 = vmatprep.subr.mxu0 0.0
        %1122 = vmatpush1.msra.mxu0 0.0
        %1123 = vmatprep.subr.mxu0 0.0
        %1124 = vmatpush1.msra.mxu0 0.0
        %1125 = vmatprep.subr.mxu0 0.0
        %1126 = vmatpush1.msra.mxu0 0.0
        %1127 = vmatprep.subr.mxu0 0.0
        %1128 = vmatpush1.msra.mxu0 0.0
        %1129 = vmatprep.subr.mxu0 0.0
        %1130 = vmatpush1.msra.mxu0 0.0
        %1131 = vmatprep.subr.mxu0 0.0
        %1132 = vmatpush1.msra.mxu0 0.0
        %1133 = vmatprep.subr.mxu0 0.0
        %1134 = vmatpush1.msra.mxu0 0.0
        %1135 = vmatprep.subr.mxu0 0.0
        %1136 = vmatpush1.msra.mxu0 0.0
        %1137 = vmatprep.subr.mxu0 0.0
        %1138 = vmatpush1.msra.mxu0 0.0
        %1139 = vmatprep.subr.mxu0 0.0
        %1140 = vmatpush1.msra.mxu0 0.0
        %1141 = vmatprep.subr.mxu0 0.0
        %1142 = vmatpush1.msra.mxu0 0.0
        %1143 = vmatprep.subr.mxu0 0.0
        %1144 = vmatpush1.msra.mxu0 %v1098
        %1145 = vmatprep.subr.mxu0 0.0
        %1146 = vmatpush1.msra.mxu0 %v1097
        %1147 = vmatprep.subr.mxu0 0.0
        %1148 = vmatpush1.msra.mxu0 %v1096
        %1149 = vmatprep.subr.mxu0 0.0
        %1150 = vmatpush1.msra.mxu0 %v1095
        %1151 = vmatprep.subr.mxu0 0.0
        %1152 = vmatpush2.msra.mxu0 0.0
        %1153 = vmatprep.subr.mxu0 0.0
        %1154 = vmatpush2.msra.mxu0 0.0
        %1155 = vmatprep.subr.mxu0 0.0
        %1156 = vmatpush2.msra.mxu0 0.0
        %1157 = vmatprep.subr.mxu0 0.0
        %1158 = vmatpush2.msra.mxu0 0.0
        %1159 = vmatprep.subr.mxu0 0.0
        %1160 = vmatpush2.msra.mxu0 0.0
        %1161 = vmatprep.subr.mxu0 0.0
        %1162 = vmatpush2.msra.mxu0 0.0
        %1163 = vmatprep.subr.mxu0 0.0
        %1164 = vmatpush2.msra.mxu0 0.0
        %1165 = vmatprep.subr.mxu0 0.0
        %1166 = vmatpush2.msra.mxu0 0.0
        %1167 = vmatprep.subr.mxu0 0.0
        %1168 = vmatpush2.msra.mxu0 0.0
        %1169 = vmatprep.subr.mxu0 0.0
        %1170 = vmatpush2.msra.mxu0 0.0
        %1171 = vmatprep.subr.mxu0 0.0
        %1172 = vmatpush2.msra.mxu0 0.0
        %1173 = vmatprep.subr.mxu0 0.0
        %1174 = vmatpush2.msra.mxu0 0.0
        %1175 = vmatprep.subr.mxu0 0.0
        %1176 = vmatpush2.msra.mxu0 0.0
        %1177 = vmatprep.subr.mxu0 0.0
        %1178 = vmatpush2.msra.mxu0 0.0
        %1179 = vmatprep.subr.mxu0 0.0
        %1180 = vmatpush2.msra.mxu0 0.0
        %1181 = vmatprep.subr.mxu0 0.0
        %1182 = vmatpush2.msra.mxu0 0.0
        %1183 = vmatprep.mubr.f32.mxu0 0.0
        %1184 = vmatmul.mubr.f32.gmra.mxu0 %v1114
        %v1185 = vpop.f32.mrf.mxu0
        %v1186 = vadd.f32 %v1106, %v1185
        %v1187 = vpop.f32.mrf.mxu0
        %1188 = vmatprep.mubr.f32.mxu0 0.0
        %1189 = vmatmul.mubr.f32.gmra.mxu0 %v1117
        %v1190 = vpop.f32.mrf.mxu0
        %v1191 = vadd.f32 %v1111, %v1190
        %v1192 = vpop.f32.mrf.mxu0
        %1193 = vdwg.mxu0
        %v1194 = vmax.f32 %v1186, 0.0
        %v1195 = vmax.f32 %v1191, 0.0
        %v1196 = vld [vmem:[%s6] sm:$0x1]
        %v1197 = vld [vmem:[#allocation2] sm:$0x1]
        %1199 = vset.pattern.permute.xlu0 0
        %1200 = vperm.xlu0 %1199, %v1197
        %v1201 = vpop.permute.xlu0 %1200
        %v1203 = vlaneseq
        %v1204 = vshrl.u32 %v1203, 7
        %v1205 = vsub.s32 0, %v1204
        %v1206 = vrot.slane %v1201, %v1205
        %vm1207 = vcmask 130048
        %v1209 = vsel %vm1207, %v1196, 0
        %1211 = vmatprep.subr.mxu0 0.0
        %1212 = vmatpush1.msra.mxu0 0.0
        %1213 = vmatprep.subr.mxu0 0.0
        %1214 = vmatpush1.msra.mxu0 0.0
        %1215 = vmatprep.subr.mxu0 0.0
        %1216 = vmatpush1.msra.mxu0 0.0
        %1217 = vmatprep.subr.mxu0 0.0
        %1218 = vmatpush1.msra.mxu0 0.0
        %1219 = vmatprep.subr.mxu0 0.0
        %1220 = vmatpush1.msra.mxu0 0.0
        %1221 = vmatprep.subr.mxu0 0.0
        %1222 = vmatpush1.msra.mxu0 0.0
        %1223 = vmatprep.subr.mxu0 0.0
        %1224 = vmatpush1.msra.mxu0 0.0
        %1225 = vmatprep.subr.mxu0 0.0
        %1226 = vmatpush1.msra.mxu0 0.0
        %1227 = vmatprep.subr.mxu0 0.0
        %1228 = vmatpush1.msra.mxu0 0.0
        %1229 = vmatprep.subr.mxu0 0.0
        %1230 = vmatpush1.msra.mxu0 0.0
        %1231 = vmatprep.subr.mxu0 0.0
        %1232 = vmatpush1.msra.mxu0 0.0
        %1233 = vmatprep.subr.mxu0 0.0
        %1234 = vmatpush1.msra.mxu0 0.0
        %1235 = vmatprep.subr.mxu0 0.0
        %1236 = vmatpush1.msra.mxu0 0.0
        %1237 = vmatprep.subr.mxu0 0.0
        %1238 = vmatpush1.msra.mxu0 0.0
        %1239 = vmatprep.subr.mxu0 0.0
        %1240 = vmatpush1.msra.mxu0 %v1195
        %1241 = vmatprep.subr.mxu0 0.0
        %1242 = vmatpush1.msra.mxu0 %v1194
        %1243 = vmatprep.subr.mxu0 0.0
        %1244 = vmatpush2.msra.mxu0 0.0
        %1245 = vmatprep.subr.mxu0 0.0
        %1246 = vmatpush2.msra.mxu0 0.0
        %1247 = vmatprep.subr.mxu0 0.0
        %1248 = vmatpush2.msra.mxu0 0.0
        %1249 = vmatprep.subr.mxu0 0.0
        %1250 = vmatpush2.msra.mxu0 0.0
        %1251 = vmatprep.subr.mxu0 0.0
        %1252 = vmatpush2.msra.mxu0 0.0
        %1253 = vmatprep.subr.mxu0 0.0
        %1254 = vmatpush2.msra.mxu0 0.0
        %1255 = vmatprep.subr.mxu0 0.0
        %1256 = vmatpush2.msra.mxu0 0.0
        %1257 = vmatprep.subr.mxu0 0.0
        %1258 = vmatpush2.msra.mxu0 0.0
        %1259 = vmatprep.subr.mxu0 0.0
        %1260 = vmatpush2.msra.mxu0 0.0
        %1261 = vmatprep.subr.mxu0 0.0
        %1262 = vmatpush2.msra.mxu0 0.0
        %1263 = vmatprep.subr.mxu0 0.0
        %1264 = vmatpush2.msra.mxu0 0.0
        %1265 = vmatprep.subr.mxu0 0.0
        %1266 = vmatpush2.msra.mxu0 0.0
        %1267 = vmatprep.subr.mxu0 0.0
        %1268 = vmatpush2.msra.mxu0 0.0
        %1269 = vmatprep.subr.mxu0 0.0
        %1270 = vmatpush2.msra.mxu0 0.0
        %1271 = vmatprep.subr.mxu0 0.0
        %1272 = vmatpush2.msra.mxu0 0.0
        %1273 = vmatprep.subr.mxu0 0.0
        %1274 = vmatpush2.msra.mxu0 0.0
        %1275 = vmatprep.mubr.f32.mxu0 0.0
        %1276 = vmatmul.mubr.f32.gmra.mxu0 %v1209
        %v1277 = vpop.f32.mrf.mxu0
        %v1278 = vadd.f32 %v1206, %v1277
        %v1279 = vpop.f32.mrf.mxu0
        %1280 = vdwg.mxu0
        %v1281 = vxor.u32 %v1278, 2147483648
        %v1282 = vmul.f32 %v1281, 1.442695
        %v1283 = vpow.pop %v1282
        %v1284 = vadd.f32 %v1283, 1.0
        %v1285 = vrcp.pop %v1284
        %v1286 = vmul.f32 1.0, %v1285
        %1287 = vst [vmem:[%s336] sm:$0x1] %v1286
        %s1288 = sand.u32 %s209, 1
        %s1289 = scalar_lea.sflag [#allocation5], %s1288
        %s1290 = sand.u32 %s209, 1
        %s1291 = scalar_lea.vmem [#allocation8], %s1290
        // Predicated region
        $region61: #{tpu_custom_call.1} parent=51 // pred_check
          %p1292 = pneg %p219
        $region62: #{tpu_custom_call.1} parent=51 // pred_check_branch
          %1294 = sbr.rel (%p1292) target = $region64
        $region63: #{tpu_custom_call.1} parent=51 // pred_region
          %s1296 = ssub.s32 16, 16
          %1297 = vsyncadd %s1289, %s1296
          %s1298 = smul.addr %s28, 16
          %s1299 = scalar_lea.hbm %s8, %s1298
          %s1301 = sshll.u32 %s1291, 4
          %s1302 = int_to_ptr.vmem [resolvable:$true] %s1301
          %1304 = dma.vmem_to_hbm [thread:$0]  %s1302, 16, %s1299, %s1289
        $region64: #{tpu_custom_call.1} parent=51 // pred_fallthru
          _
      $region52: #{tpu_custom_call.1} parent=5 // pred_fallthru
        _
      %p1305 = scmp.le.s32.totalorder 2, %s23
      // Predicated region
      $region65: #{tpu_custom_call.1} parent=5 // pred_check
        %p1306 = pneg %p1305
      $region66: #{tpu_custom_call.1} parent=5 // pred_check_branch
        %1308 = sbr.rel (%p1306) target = $region68
      $region67: #{tpu_custom_call.1} parent=5 // pred_region
        %s1309 = ssub.s32 %s23, 2
        // Predicated region
        $region69: #{tpu_custom_call.1} parent=67 // pred_check
          %p1310 = pneg %p225
        $region70: #{tpu_custom_call.1} parent=67 // pred_check_branch
          %1312 = sbr.rel (%p1310) target = $region72
        $region71: #{tpu_custom_call.1} parent=67 // pred_region
          %s1313 = sand.u32 %s210, 1
          %s1314 = scalar_lea.sflag [#allocation5], %s1313
          %s1315 = sand.u32 %s210, 1
          %s1316 = scalar_lea.vmem [#allocation8], %s1315
          %1317 = dma.done %s1314, 16
        $region72: #{tpu_custom_call.1} parent=67 // pred_fallthru
          _
      $region68: #{tpu_custom_call.1} parent=5 // pred_fallthru
        _
    $region6: #{tpu_custom_call.1} parent=1 // loop_footer
      %s27 = sadd.s32 1, %s23
    $region7: #{tpu_custom_call.1} parent=1 // loop_footer_branch
      %22 = sbr.rel target = $region3
    $region8: #{tpu_custom_call.1} parent=1 // loop_exit
      _
    %1318 = vsyncpa [#allocation4], 1
    %s1319 = scalar_lea.sflag [#allocation4], 1
    %1320 = vsyncpa %s1319, 1
    %1321 = vsyncpa [#allocation7], 1
    %1322 = vsyncpa [#allocation5], 1
    %s1323 = scalar_lea.sflag [#allocation5], 1
    %1324 = vsyncpa %s1323, 1

</llo_original>
